<compile_context>
chip_gen: v7x
topology: tpu7x:2x2x1
jax: 0.10.0
libtpu: 0.0.40
codegen_flags: <defaults>
</compile_context>

<pallas_src>
import functools

import jax
import jax.numpy as jnp
import numpy as np
from jax import lax
from jax.experimental import pallas as pl
from jax.experimental.pallas import tpu as pltpu

_NEG_INF = float("-inf")


def _split_ce_kernel(splits, nsplits, vocab, n_total,
                     info_ref,                                   # scalar prefetch (SMEM)
                     h_ref, w_ref, b_ref, tv_ref, tb_ref, tgt_ref,
                     out_ref,
                     m_ref, l_ref, z_ref, hv_ref):
    i = pl.program_id(0)          # token-tile index (parallel)
    j = pl.program_id(1)          # vocab-tile index (reduction, innermost)
    nj = pl.num_programs(1)

    n_tile = h_ref.shape[0]
    v_tile = w_ref.shape[0]

    h = h_ref[...]                # [n_tile, H]
    tgt = tgt_ref[...]            # [n_tile, 1] int32

    # ---------------- init per-token-tile state on the first vocab tile ----------------
    @pl.when(j == 0)
    def _init():
        z_ref[...] = jnp.zeros_like(z_ref)
        m_ref[...] = jnp.full_like(m_ref, _NEG_INF)
        l_ref[...] = jnp.zeros_like(l_ref)
        if nsplits > 1:
            # head logits of the tail "bucket tokens" (tiny), computed once per token tile
            hv = lax.dot_general(h, tv_ref[...],
                                 dimension_numbers=(((1,), (1,)), ((), ())),
                                 preferred_element_type=jnp.float32)
            hv = hv + tb_ref[...].astype(jnp.float32)            # [n_tile, nsplits-1]
            hv_ref[...] = hv
            m0 = jnp.max(hv, axis=-1, keepdims=True)
            m_ref[0] = m0
            l_ref[0] = jnp.sum(jnp.exp(hv - m0), axis=-1, keepdims=True)

    # ---------------- logits for this (token tile, vocab tile) -------------------------
    # contract on H of both operands -> no transpose of the weight tile before the MXU
    logits = lax.dot_general(h, w_ref[...],
                             dimension_numbers=(((1,), (1,)), ((), ())),
                             preferred_element_type=jnp.float32)
    logits = logits + b_ref[...].astype(jnp.float32)             # [n_tile, v_tile] f32

    col = j * v_tile + lax.broadcasted_iota(jnp.int32, (1, v_tile), 1)   # global vocab id

    # selected (target) logit — exactly one hit per row across all vocab tiles
    sel = col == tgt
    z_ref[...] = z_ref[...] + jnp.sum(jnp.where(sel, logits, 0.0),
                                      axis=-1, keepdims=True)

    info = info_ref[j]            # >=0: tile fully inside split `info`; -1: boundary/ragged

    # -------- fast path: tile entirely inside one split, no masking needed -------------
    @pl.when(info >= 0)
    def _interior():
        sid = info
        m_old = m_ref[sid]
        m_new = jnp.maximum(m_old, jnp.max(logits, axis=-1, keepdims=True))
        p_sum = jnp.sum(jnp.exp(logits - m_new), axis=-1, keepdims=True)
        l_ref[sid] = jnp.exp(m_old - m_new) * l_ref[sid] + p_sum
        m_ref[sid] = m_new

    # -------- boundary / ragged tile: masked per-split online LSE ----------------------
    @pl.when(info < 0)
    def _boundary():
        valid, m_olds, m_news = [], [], []
        for s in range(nsplits):
            lo = splits[s]
            hi = min(splits[s + 1], vocab)
            v_s = (col >= lo) & (col < hi)                       # masks padded cols too
            t_max = jnp.max(jnp.where(v_s, logits, _NEG_INF), axis=-1, keepdims=True)
            m_old = m_ref[s]
            valid.append(v_s)
            m_olds.append(m_old)
            m_news.append(jnp.maximum(m_old, t_max))

        # single exp over the tile: each column normalized by its own split's running max
        m_col = jnp.where(valid[0], m_news[0], 0.0)
        any_valid = valid[0]
        for s in range(1, nsplits):
            m_col = jnp.where(valid[s], m_news[s], m_col)
            any_valid = any_valid | valid[s]
        p = jnp.where(any_valid, jnp.exp(logits - m_col), 0.0)

        for s in range(nsplits):
            l_sum = jnp.sum(jnp.where(valid[s], p, 0.0), axis=-1, keepdims=True)
            alpha = jnp.where(m_news[s] == _NEG_INF, 0.0,
                              jnp.exp(m_olds[s] - m_news[s]))
            l_ref[s] = alpha * l_ref[s] + l_sum
            m_ref[s] = m_news[s]

    # ---------------- finalize per-row loss after the last vocab tile ------------------
    @pl.when(j == nj - 1)
    def _finalize():
        bucket = jnp.zeros_like(tgt)
        for idx in range(1, nsplits):
            bucket = bucket + (tgt >= splits[idx]).astype(jnp.int32)

        m_b = jnp.zeros((n_tile, 1), jnp.float32)
        l_b = jnp.ones((n_tile, 1), jnp.float32)
        for s in range(nsplits):
            hit = bucket == s
            m_b = jnp.where(hit, m_ref[s], m_b)
            l_b = jnp.where(hit, l_ref[s], l_b)
        # log-softmax value of the target inside its own split (full head for bucket 0)
        lp_tgt = z_ref[...] - m_b - jnp.log(l_b)

        if nsplits > 1:
            head_lp = hv_ref[...] - m_ref[0] - jnp.log(l_ref[0])  # head log-probs of tail cols
            extra = jnp.zeros((n_tile, 1), jnp.float32)
            for b in range(1, nsplits):
                c = nsplits - 1 - b                               # == softmaxed_head_res[:, -b]
                extra = extra + jnp.where(bucket == b, head_lp[:, c:c + 1], 0.0)
            loss_row = -(lp_tgt + extra)
        else:
            loss_row = -lp_tgt

        row = i * n_tile + lax.broadcasted_iota(jnp.int32, (n_tile, 1), 0)
        out_ref[...] = jnp.where(row < n_total, loss_row, 0.0)


class SplitCrossEntropyLossPallas:
    """Pallas/TPU forward pass of the AWD-LSTM SplitCrossEntropyLoss."""
    # TODO(synk): the torch module's verbose/self.stats bookkeeping is host-side only and omitted.

    def __init__(self, hidden_size, splits):
        self.hidden_size = hidden_size
        self.splits = [0] + list(splits) + [100 * 1000000]
        self.nsplits = len(self.splits) - 1
        if self.nsplits > 1:
            self.tail_vectors = jnp.zeros((self.nsplits - 1, hidden_size), jnp.float32)
            self.tail_bias = jnp.zeros((self.nsplits - 1,), jnp.float32)
        else:
            self.tail_vectors = None
            self.tail_bias = None

    def __call__(self, weight, bias, hiddens, targets, *,
                 n_tile=1024, v_tile=512, matmul_dtype=None):
        out_dtype = weight.dtype
        if hiddens.ndim > 2:
            hiddens = hiddens.reshape(-1, hiddens.shape[-1])
        if matmul_dtype is not None:                     # e.g. jnp.bfloat16 for f32 callers
            weight = weight.astype(matmul_dtype)
            hiddens = hiddens.astype(matmul_dtype)

        n_rows, hdim = hiddens.shape
        vocab = weight.shape[0]
        nsplits = self.nsplits
        ntail = nsplits - 1
        tdim = max(ntail, 1)

        # ---- tile sizing: sublane/lane aligned, never larger than the arrays ----------
        if n_rows >= 8:
            n_tile = max(8, min((n_tile // 8) * 8, (n_rows // 8) * 8))
        else:
            n_tile = n_rows
        if vocab >= 128:
            v_tile = max(128, min((v_tile // 128) * 128, (vocab // 128) * 128))
        else:
            v_tile = vocab

        w_item = jnp.dtype(weight.dtype).itemsize
        h_item = jnp.dtype(hiddens.dtype).itemsize

        def vmem_estimate(nt, vt):
            return (2 * vt * hdim * w_item               # weight double-buffer (streamed)
                    + nt * hdim * h_item                 # hiddens, single-buffered
                    + 2 * vt * 4                         # bias tiles
                    + 4 * nt * 4                         # targets + output buffers
                    + (2 * nsplits * nt + nt + nt * tdim) * 4   # accumulator scratch
                    + 2 * nt * vt * 4)                   # f32 logits / exp temporaries

        # budget fits v7x's 64 MiB/TC with headroom; plenty of slack on v5e/v6e (128 MiB)
        VMEM_BUDGET = 48 * 1024 * 1024
        while vmem_estimate(n_tile, v_tile) > VMEM_BUDGET and n_tile > 8:
            n_tile = max(8, ((n_tile // 2) // 8) * 8)
        while vmem_estimate(n_tile, v_tile) > VMEM_BUDGET and v_tile > 128:
            v_tile = max(128, ((v_tile // 2) // 128) * 128)

        # keep the number of token tiles even when possible so both v7x TCs stay busy
        n_tok_tiles = -(-n_rows // n_tile)
        if n_tok_tiles > 1 and n_tok_tiles % 2 == 1:
            cand = ((-(-n_rows // (n_tok_tiles + 1)) + 7) // 8) * 8
            cand = max(8, min(cand, n_tile))
            if (-(-n_rows // cand)) % 2 == 0 and vmem_estimate(cand, v_tile) <= VMEM_BUDGET:
                n_tile = cand

        grid = (-(-n_rows // n_tile), -(-vocab // v_tile))

        # ---- scalar-prefetched per-vocab-tile split id: >=0 -> interior (fast) tile,
        #      -1 -> split-boundary or ragged tile (masked path) --------------------------
        tile_info = np.full((grid[1],), -1, dtype=np.int32)
        for jt in range(grid[1]):
            lo, hi = jt * v_tile, (jt + 1) * v_tile
            if hi > vocab:
                continue                                  # ragged last tile -> masked path
            for s in range(nsplits):
                if lo >= self.splits[s] and hi <= min(self.splits[s + 1], vocab):
                    tile_info[jt] = s
                    break
        tile_info = jnp.asarray(tile_info)

        if ntail > 0:
            tv = self.tail_vectors.astype(weight.dtype)
            tb = self.tail_bias.astype(jnp.float32).reshape(1, ntail)
        else:
            tv = jnp.zeros((tdim, hdim), weight.dtype)
            tb = jnp.zeros((1, tdim), jnp.float32)

        bias2d = bias.reshape(1, vocab)
        tgt2d = targets.astype(jnp.int32).reshape(-1, 1)

        kern = functools.partial(_split_ce_kernel, tuple(self.splits),
                                 nsplits, vocab, n_rows)

        cost = pl.CostEstimate(
            flops=2 * n_rows * (vocab + ntail) * hdim,
            transcendentals=n_rows * (vocab + ntail),
            bytes_accessed=(grid[0] * vocab * hdim * w_item     # weight re-streamed per token tile
                            + n_rows * hdim * h_item            # hiddens fetched once per token tile
                            + grid[0] * vocab * jnp.dtype(bias.dtype).itemsize
                            + 2 * n_rows * 4),
        )

        vmem_limit = int(min(max(2 * vmem_estimate(n_tile, v_tile), 32 * 1024 * 1024),
                             56 * 1024 * 1024))

        per_row = pl.pallas_call(
            kern,
            out_shape=jax.ShapeDtypeStruct((n_rows, 1), jnp.float32),
            grid_spec=pltpu.PrefetchScalarGridSpec(
                num_scalar_prefetch=1,
                grid=grid,
                in_specs=[
                    pl.BlockSpec((n_tile, hdim), lambda i, j, info: (i, 0),
                                 pipeline_mode=pl.Buffered(1)),               # hiddens (resident)
                    pl.BlockSpec((v_tile, hdim), lambda i, j, info: (j, 0)),  # weight (streamed)
                    pl.BlockSpec((1, v_tile), lambda i, j, info: (0, j)),     # bias
                    pl.BlockSpec((tdim, hdim), lambda i, j, info: (0, 0)),    # tail vectors
                    pl.BlockSpec((1, tdim), lambda i, j, info: (0, 0)),       # tail bias
                    pl.BlockSpec((n_tile, 1), lambda i, j, info: (i, 0)),     # targets
                ],
                out_specs=pl.BlockSpec((n_tile, 1), lambda i, j, info: (i, 0)),
                scratch_shapes=[
                    pltpu.VMEM((nsplits, n_tile, 1), jnp.float32),   # running max per split
                    pltpu.VMEM((nsplits, n_tile, 1), jnp.float32),   # running sum-exp per split
                    pltpu.VMEM((n_tile, 1), jnp.float32),            # selected target logit
                    pltpu.VMEM((n_tile, tdim), jnp.float32),         # head logits of tail vectors
                ],
            ),
            compiler_params=pltpu.CompilerParams(
                dimension_semantics=("parallel", "arbitrary"),
                vmem_limit_bytes=vmem_limit),
            cost_estimate=cost,
        )(tile_info, hiddens, weight, bias2d, tv, tb, tgt2d)

        total = jnp.sum(per_row) / targets.shape[0]
        return total.astype(out_dtype)


def _ref_loss(weight, bias, tail_vectors, tail_bias, hiddens, targets, splits):
    """Pure-JAX (f32) reference for the same math."""
    weight = weight.astype(jnp.float32)
    bias = bias.astype(jnp.float32)
    hiddens = hiddens.astype(jnp.float32)
    nsplits = len(splits) - 1
    vocab = weight.shape[0]
    if nsplits > 1:
        head_w = jnp.concatenate([weight[splits[0]:splits[1]],
                                  tail_vectors.astype(jnp.float32)], axis=0)
        head_b = jnp.concatenate([bias[splits[0]:splits[1]],
                                  tail_bias.astype(jnp.float32)], axis=0)
    else:
        head_w, head_b = weight, bias
    head_lsm = jax.nn.log_softmax(hiddens @ head_w.T + head_b, axis=-1)
    dh = head_w.shape[0]
    bucket = jnp.zeros_like(targets)
    for idx in range(1, nsplits):
        bucket = bucket + (targets >= splits[idx]).astype(targets.dtype)
    lp0 = jnp.take_along_axis(head_lsm, jnp.clip(targets, 0, dh - 1)[:, None], axis=1)[:, 0]
    total = -jnp.sum(jnp.where(bucket == 0, lp0, 0.0))
    for bidx in range(1, nsplits):
        s, e = splits[bidx], min(splits[bidx + 1], vocab)
        tail_lsm = jax.nn.log_softmax(hiddens @ weight[s:e].T + bias[s:e], axis=-1)
        idxs = jnp.clip(targets - s, 0, e - s - 1)
        lpt = jnp.take_along_axis(tail_lsm, idxs[:, None], axis=1)[:, 0]
        lph = head_lsm[:, dh - bidx]
        total = total - jnp.sum(jnp.where(bucket == bidx, lph + lpt, 0.0))
    return total / targets.shape[0]


if __name__ == "__main__":
    key = jax.random.PRNGKey(0)
    H, V, N = 64, 520, 70               # hidden, vocab, num tokens (small demo sizes)
    splits_cfg = [100, 256]             # buckets [0,100), [100,256), [256,V)

    k1, k2, k3, k4, k5, k6 = jax.random.split(key, 6)
    weight = jax.random.normal(k1, (V, H), jnp.float32) * 0.1
    bias = jax.random.normal(k2, (V,), jnp.float32) * 0.01
    hiddens = jax.random.normal(k3, (N, H), jnp.float32)
    targets = jax.random.randint(k4, (N,), 0, V, dtype=jnp.int32)

    loss_mod = SplitCrossEntropyLossPallas(H, splits_cfg)
    # non-zero tail vectors/bias so the head-column mapping for tail buckets is exercised
    loss_mod.tail_vectors = jax.random.normal(k5, (loss_mod.nsplits - 1, H), jnp.float32) * 0.1
    loss_mod.tail_bias = jax.random.normal(k6, (loss_mod.nsplits - 1,), jnp.float32) * 0.01

    ref = _ref_loss(weight, bias, loss_mod.tail_vectors, loss_mod.tail_bias,
                    hiddens, targets, loss_mod.splits)

    # 1) small tiles: several (ragged) token tiles, interior fast-path vocab tiles,
    #    two split-boundary tiles, and a ragged masked last vocab tile.
    loss = jax.block_until_ready(
        loss_mod(weight, bias, hiddens, targets, n_tile=32, v_tile=128))
    assert abs(float(loss) - float(ref)) < 2e-3, (float(loss), float(ref))

    # 2) default (large, VMEM-budgeted) tiles: one boundary tile spans all three splits.
    loss_big = jax.block_until_ready(loss_mod(weight, bias, hiddens, targets))
    assert abs(float(loss_big) - float(ref)) < 2e-3, (float(loss_big), float(ref))

    # 3) bf16 matmul path: weight/hiddens cast in the wrapper, accumulation stays f32.
    loss_bf16 = jax.block_until_ready(
        loss_mod(weight, bias, hiddens, targets, n_tile=32, v_tile=128,
                 matmul_dtype=jnp.bfloat16))
    assert abs(float(loss_bf16) - float(ref)) < 0.1, (float(loss_bf16), float(ref))

    print("KERNEL_OK")
</pallas_src>

<mosaic_0001>
module attributes {stable_mosaic.version = 11 : i64} {
  func.func @_split_ce_kernel(%arg0: i32, %arg1: i32, %arg2: memref<5xi32, #tpu.memory_space<smem>>, %arg3: memref<32x64xf32, #tpu.memory_space<vmem>>, %arg4: memref<128x64xf32, #tpu.memory_space<vmem>>, %arg5: memref<1x128xf32, #tpu.memory_space<vmem>>, %arg6: memref<2x64xf32, #tpu.memory_space<vmem>>, %arg7: memref<1x2xf32, #tpu.memory_space<vmem>>, %arg8: memref<32x1xi32, #tpu.memory_space<vmem>>, %arg9: memref<32x1xf32, #tpu.memory_space<vmem>>, %arg10: memref<3x32x1xf32, #tpu.memory_space<vmem>>, %arg11: memref<3x32x1xf32, #tpu.memory_space<vmem>>, %arg12: memref<32x1xf32, #tpu.memory_space<vmem>>, %arg13: memref<32x2xf32, #tpu.memory_space<vmem>>) attributes {dimension_semantics = [#tpu.dimension_semantics<parallel>, #tpu.dimension_semantics<arbitrary>], iteration_bounds = array<i64: 3, 5>, scalar_prefetch = 1 : i64, scratch_operands = 4 : i64, tpu.core_type = #tpu.core_type<tc>, window_params = [{pipeline_mode = #tpu.pipeline_mode<synchronous>, transform_indices = @transform_0, window_bounds = array<i64: 32, 64>}, {transform_indices = @transform_1, window_bounds = array<i64: 128, 64>}, {transform_indices = @transform_2, window_bounds = array<i64: 1, 128>}, {pipeline_mode = #tpu.pipeline_mode<synchronous>, transform_indices = @transform_3, window_bounds = array<i64: 2, 64>}, {pipeline_mode = #tpu.pipeline_mode<synchronous>, transform_indices = @transform_4, window_bounds = array<i64: 1, 2>}, {transform_indices = @transform_5, window_bounds = array<i64: 32, 1>}, {transform_indices = @transform_6, window_bounds = array<i64: 32, 1>}]} {
    %c0 = arith.constant 0 : index
    %c0_0 = arith.constant 0 : index
    %0 = vector.load %arg3[%c0, %c0_0] : memref<32x64xf32, #tpu.memory_space<vmem>>, vector<32x64xf32>
    %c0_1 = arith.constant 0 : index
    %c0_2 = arith.constant 0 : index
    %1 = vector.load %arg8[%c0_1, %c0_2] : memref<32x1xi32, #tpu.memory_space<vmem>>, vector<32x1xi32>
    %c0_i32 = arith.constant 0 : i32
    %2 = arith.cmpi eq, %arg1, %c0_i32 : i32
    %3 = arith.extui %2 : i1 to i32
    %c0_i32_3 = arith.constant 0 : i32
    %4 = arith.cmpi ne, %3, %c0_i32_3 : i32
    scf.if %4 {
      %cst_19 = arith.constant 0.000000e+00 : f32
      %35 = vector.broadcast %cst_19 : f32 to vector<32x1xf32>
      %c0_20 = arith.constant 0 : index
      %c0_21 = arith.constant 0 : index
      %36 = vector.load %arg12[%c0_20, %c0_21] : memref<32x1xf32, #tpu.memory_space<vmem>>, vector<32x1xf32>
      tpu.vector_store %arg12[%c0_20, %c0_21], %35 {strides = array<i32>} : memref<32x1xf32, #tpu.memory_space<vmem>>, vector<32x1xf32>,
      %cst_22 = arith.constant 0xFF800000 : f32
      %37 = vector.broadcast %cst_22 : f32 to vector<3x32x1xf32>
      %c0_23 = arith.constant 0 : index
      %c0_24 = arith.constant 0 : index
      %c0_25 = arith.constant 0 : index
      %38 = vector.load %arg10[%c0_23, %c0_24, %c0_25] : memref<3x32x1xf32, #tpu.memory_space<vmem>>, vector<3x32x1xf32>
      tpu.vector_store %arg10[%c0_23, %c0_24, %c0_25], %37 {strides = array<i32>} : memref<3x32x1xf32, #tpu.memory_space<vmem>>, vector<3x32x1xf32>,
      %cst_26 = arith.constant 0.000000e+00 : f32
      %39 = vector.broadcast %cst_26 : f32 to vector<3x32x1xf32>
      %c0_27 = arith.constant 0 : index
      %c0_28 = arith.constant 0 : index
      %c0_29 = arith.constant 0 : index
      %40 = vector.load %arg11[%c0_27, %c0_28, %c0_29] : memref<3x32x1xf32, #tpu.memory_space<vmem>>, vector<3x32x1xf32>
      tpu.vector_store %arg11[%c0_27, %c0_28, %c0_29], %39 {strides = array<i32>} : memref<3x32x1xf32, #tpu.memory_space<vmem>>, vector<3x32x1xf32>,
      %c0_30 = arith.constant 0 : index
      %c0_31 = arith.constant 0 : index
      %41 = vector.load %arg6[%c0_30, %c0_31] : memref<2x64xf32, #tpu.memory_space<vmem>>, vector<2x64xf32>
      %cst_32 = arith.constant dense<0.000000e+00> : vector<32x2xf32>
      %42 = tpu.matmul %0, %41, %cst_32 {dimension_numbers = #tpu.dot_dimension_numbers<[1], [1], [0], [0], [0, 0, 1, 0], [], []>} : vector<32x64xf32>, vector<2x64xf32>, vector<32x2xf32> -> vector<32x2xf32>
      %c0_33 = arith.constant 0 : index
      %c0_34 = arith.constant 0 : index
      %43 = vector.load %arg7[%c0_33, %c0_34] : memref<1x2xf32, #tpu.memory_space<vmem>>, vector<1x2xf32>
      %44 = vector.broadcast %43 : vector<1x2xf32> to vector<32x2xf32>
      %45 = arith.addf %42, %44 : vector<32x2xf32>
      %c0_35 = arith.constant 0 : index
      %c0_36 = arith.constant 0 : index
      %46 = vector.load %arg13[%c0_35, %c0_36] : memref<32x2xf32, #tpu.memory_space<vmem>>, vector<32x2xf32>
      tpu.vector_store %arg13[%c0_35, %c0_36], %45 {strides = array<i32>} : memref<32x2xf32, #tpu.memory_space<vmem>>, vector<32x2xf32>,
      %cst_37 = arith.constant dense<0xFF800000> : vector<32xf32>
      %47 = vector.multi_reduction <maximumf>, %45, %cst_37 [1] : vector<32x2xf32> to vector<32xf32>
      %48 = vector.shape_cast %47 : vector<32xf32> to vector<32x1xf32>
      %c0_38 = arith.constant 0 : index
      %c0_39 = arith.constant 0 : index
      %c0_40 = arith.constant 0 : index
      %49 = vector.load %arg10[%c0_38, %c0_39, %c0_40] : memref<3x32x1xf32, #tpu.memory_space<vmem>>, vector<1x32x1xf32>
      %50 = vector.shape_cast %49 : vector<1x32x1xf32> to vector<32x1xf32>
      %51 = vector.shape_cast %48 : vector<32x1xf32> to vector<1x32x1xf32>
      tpu.vector_store %arg10[%c0_38, %c0_39, %c0_40], %51 {strides = array<i32>} : memref<3x32x1xf32, #tpu.memory_space<vmem>>, vector<1x32x1xf32>,
      %52 = vector.broadcast %48 : vector<32x1xf32> to vector<32x2xf32>
      %53 = arith.subf %45, %52 : vector<32x2xf32>
      %54 = math.exp %53 : vector<32x2xf32>
      %cst_41 = arith.constant dense<0.000000e+00> : vector<32xf32>
      %55 = vector.multi_reduction <add>, %54, %cst_41 [1] : vector<32x2xf32> to vector<32xf32>
      %56 = vector.shape_cast %55 : vector<32xf32> to vector<32x1xf32>
      %c0_42 = arith.constant 0 : index
      %c0_43 = arith.constant 0 : index
      %c0_44 = arith.constant 0 : index
      %57 = vector.load %arg11[%c0_42, %c0_43, %c0_44] : memref<3x32x1xf32, #tpu.memory_space<vmem>>, vector<1x32x1xf32>
      %58 = vector.shape_cast %57 : vector<1x32x1xf32> to vector<32x1xf32>
      %59 = vector.shape_cast %56 : vector<32x1xf32> to vector<1x32x1xf32>
      tpu.vector_store %arg11[%c0_42, %c0_43, %c0_44], %59 {strides = array<i32>} : memref<3x32x1xf32, #tpu.memory_space<vmem>>, vector<1x32x1xf32>,
    } else {
    }
    %c0_4 = arith.constant 0 : index
    %c0_5 = arith.constant 0 : index
    %5 = vector.load %arg4[%c0_4, %c0_5] : memref<128x64xf32, #tpu.memory_space<vmem>>, vector<128x64xf32>
    %cst = arith.constant dense<0.000000e+00> : vector<32x128xf32>
    %6 = tpu.matmul %0, %5, %cst {dimension_numbers = #tpu.dot_dimension_numbers<[1], [1], [0], [0], [0, 0, 1, 0], [], []>} : vector<32x64xf32>, vector<128x64xf32>, vector<32x128xf32> -> vector<32x128xf32>
    %c0_6 = arith.constant 0 : index
    %c0_7 = arith.constant 0 : index
    %7 = vector.load %arg5[%c0_6, %c0_7] : memref<1x128xf32, #tpu.memory_space<vmem>>, vector<1x128xf32>
    %8 = vector.broadcast %7 : vector<1x128xf32> to vector<32x128xf32>
    %9 = arith.addf %6, %8 : vector<32x128xf32>
    %c128_i32 = arith.constant 128 : i32
    %10 = arith.muli %arg1, %c128_i32 : i32
    %11 = tpu.iota {dimensions = array<i32: 1>} : vector<1x128xi32>
    %12 = vector.broadcast %10 : i32 to vector<1x128xi32>
    %13 = arith.addi %12, %11 : vector<1x128xi32>
    %14 = vector.broadcast %13 : vector<1x128xi32> to vector<32x128xi32>
    %15 = vector.broadcast %1 : vector<32x1xi32> to vector<32x128xi32>
    %16 = arith.cmpi eq, %14, %15 : vector<32x128xi32>
    %c0_8 = arith.constant 0 : index
    %c0_9 = arith.constant 0 : index
    %17 = vector.load %arg12[%c0_8, %c0_9] : memref<32x1xf32, #tpu.memory_space<vmem>>, vector<32x1xf32>
    %cst_10 = arith.constant 0.000000e+00 : f32
    %18 = vector.broadcast %cst_10 : f32 to vector<32x128xf32>
    %19 = arith.select %16, %9, %18 : vector<32x128xi1>, vector<32x128xf32>
    %cst_11 = arith.constant dense<0.000000e+00> : vector<32xf32>
    %20 = vector.multi_reduction <add>, %19, %cst_11 [1] : vector<32x128xf32> to vector<32xf32>
    %21 = vector.shape_cast %20 : vector<32xf32> to vector<32x1xf32>
    %22 = arith.addf %17, %21 : vector<32x1xf32>
    %c0_12 = arith.constant 0 : index
    %c0_13 = arith.constant 0 : index
    %23 = vector.load %arg12[%c0_12, %c0_13] : memref<32x1xf32, #tpu.memory_space<vmem>>, vector<32x1xf32>
    tpu.vector_store %arg12[%c0_12, %c0_13], %22 {strides = array<i32>} : memref<32x1xf32, #tpu.memory_space<vmem>>, vector<32x1xf32>,
    %24 = arith.index_cast %arg1 : i32 to index
    %25 = memref.load %arg2[%24] : memref<5xi32, #tpu.memory_space<smem>>
    %c0_i32_14 = arith.constant 0 : i32
    %26 = arith.cmpi sge, %25, %c0_i32_14 : i32
    %27 = arith.extui %26 : i1 to i32
    %c0_i32_15 = arith.constant 0 : i32
    %28 = arith.cmpi ne, %27, %c0_i32_15 : i32
    scf.if %28 {
      %35 = arith.index_cast %25 : i32 to index
      %c0_19 = arith.constant 0 : index
      %c0_20 = arith.constant 0 : index
      %36 = vector.load %arg10[%35, %c0_19, %c0_20] : memref<3x32x1xf32, #tpu.memory_space<vmem>>, vector<1x32x1xf32>
      %37 = vector.shape_cast %36 : vector<1x32x1xf32> to vector<32x1xf32>
      %cst_21 = arith.constant dense<0xFF800000> : vector<32xf32>
      %38 = vector.multi_reduction <maximumf>, %9, %cst_21 [1] : vector<32x128xf32> to vector<32xf32>
      %39 = vector.shape_cast %38 : vector<32xf32> to vector<32x1xf32>
      %40 = arith.maximumf %37, %39 : vector<32x1xf32>
      %41 = vector.broadcast %40 : vector<32x1xf32> to vector<32x128xf32>
      %42 = arith.subf %9, %41 : vector<32x128xf32>
      %43 = math.exp %42 : vector<32x128xf32>
      %cst_22 = arith.constant dense<0.000000e+00> : vector<32xf32>
      %44 = vector.multi_reduction <add>, %43, %cst_22 [1] : vector<32x128xf32> to vector<32xf32>
      %45 = vector.shape_cast %44 : vector<32xf32> to vector<32x1xf32>
      %46 = arith.subf %37, %40 : vector<32x1xf32>
      %47 = math.exp %46 : vector<32x1xf32>
      %48 = arith.index_cast %25 : i32 to index
      %c0_23 = arith.constant 0 : index
      %c0_24 = arith.constant 0 : index
      %49 = vector.load %arg11[%48, %c0_23, %c0_24] : memref<3x32x1xf32, #tpu.memory_space<vmem>>, vector<1x32x1xf32>
      %50 = vector.shape_cast %49 : vector<1x32x1xf32> to vector<32x1xf32>
      %51 = arith.mulf %47, %50 : vector<32x1xf32>
      %52 = arith.addf %51, %45 : vector<32x1xf32>
      %53 = arith.index_cast %25 : i32 to index
      %c0_25 = arith.constant 0 : index
      %c0_26 = arith.constant 0 : index
      %54 = vector.load %arg11[%53, %c0_25, %c0_26] : memref<3x32x1xf32, #tpu.memory_space<vmem>>, vector<1x32x1xf32>
      %55 = vector.shape_cast %54 : vector<1x32x1xf32> to vector<32x1xf32>
      %56 = vector.shape_cast %52 : vector<32x1xf32> to vector<1x32x1xf32>
      tpu.vector_store %arg11[%53, %c0_25, %c0_26], %56 {strides = array<i32>} : memref<3x32x1xf32, #tpu.memory_space<vmem>>, vector<1x32x1xf32>,
      %57 = arith.index_cast %25 : i32 to index
      %c0_27 = arith.constant 0 : index
      %c0_28 = arith.constant 0 : index
      %58 = vector.load %arg10[%57, %c0_27, %c0_28] : memref<3x32x1xf32, #tpu.memory_space<vmem>>, vector<1x32x1xf32>
      %59 = vector.shape_cast %58 : vector<1x32x1xf32> to vector<32x1xf32>
      %60 = vector.shape_cast %40 : vector<32x1xf32> to vector<1x32x1xf32>
      tpu.vector_store %arg10[%57, %c0_27, %c0_28], %60 {strides = array<i32>} : memref<3x32x1xf32, #tpu.memory_space<vmem>>, vector<1x32x1xf32>,
    } else {
    }
    %c0_i32_16 = arith.constant 0 : i32
    %29 = arith.cmpi slt, %25, %c0_i32_16 : i32
    %30 = arith.extui %29 : i1 to i32
    %c0_i32_17 = arith.constant 0 : i32
    %31 = arith.cmpi ne, %30, %c0_i32_17 : i32
    scf.if %31 {
      %c0_i32_19 = arith.constant 0 : i32
      %35 = vector.broadcast %c0_i32_19 : i32 to vector<1x128xi32>
      %36 = arith.cmpi sge, %13, %35 : vector<1x128xi32>
      %c100_i32 = arith.constant 100 : i32
      %37 = vector.broadcast %c100_i32 : i32 to vector<1x128xi32>
      %38 = arith.cmpi slt, %13, %37 : vector<1x128xi32>
      %39 = arith.andi %36, %38 : vector<1x128xi1>
      %cst_20 = arith.constant 0xFF800000 : f32
      %40 = vector.shape_cast %39 : vector<1x128xi1> to vector<1x128xi1>
      %41 = vector.broadcast %40 : vector<1x128xi1> to vector<32x128xi1>
      %42 = vector.broadcast %cst_20 : f32 to vector<32x128xf32>
      %43 = arith.select %41, %9, %42 : vector<32x128xi1>, vector<32x128xf32>
      %cst_21 = arith.constant dense<0xFF800000> : vector<32xf32>
      %44 = vector.multi_reduction <maximumf>, %43, %cst_21 [1] : vector<32x128xf32> to vector<32xf32>
      %45 = vector.shape_cast %44 : vector<32xf32> to vector<32x1xf32>
      %c0_22 = arith.constant 0 : index
      %c0_23 = arith.constant 0 : index
      %c0_24 = arith.constant 0 : index
      %46 = vector.load %arg10[%c0_22, %c0_23, %c0_24] : memref<3x32x1xf32, #tpu.memory_space<vmem>>, vector<1x32x1xf32>
      %47 = vector.shape_cast %46 : vector<1x32x1xf32> to vector<32x1xf32>
      %48 = arith.maximumf %47, %45 : vector<32x1xf32>
      %c100_i32_25 = arith.constant 100 : i32
      %49 = vector.broadcast %c100_i32_25 : i32 to vector<1x128xi32>
      %50 = arith.cmpi sge, %13, %49 : vector<1x128xi32>
      %c256_i32 = arith.constant 256 : i32
      %51 = vector.broadcast %c256_i32 : i32 to vector<1x128xi32>
      %52 = arith.cmpi slt, %13, %51 : vector<1x128xi32>
      %53 = arith.andi %50, %52 : vector<1x128xi1>
      %cst_26 = arith.constant 0xFF800000 : f32
      %54 = vector.shape_cast %53 : vector<1x128xi1> to vector<1x128xi1>
      %55 = vector.broadcast %54 : vector<1x128xi1> to vector<32x128xi1>
      %56 = vector.broadcast %cst_26 : f32 to vector<32x128xf32>
      %57 = arith.select %55, %9, %56 : vector<32x128xi1>, vector<32x128xf32>
      %cst_27 = arith.constant dense<0xFF800000> : vector<32xf32>
      %58 = vector.multi_reduction <maximumf>, %57, %cst_27 [1] : vector<32x128xf32> to vector<32xf32>
      %59 = vector.shape_cast %58 : vector<32xf32> to vector<32x1xf32>
      %c1 = arith.constant 1 : index
      %c0_28 = arith.constant 0 : index
      %c0_29 = arith.constant 0 : index
      %60 = vector.load %arg10[%c1, %c0_28, %c0_29] : memref<3x32x1xf32, #tpu.memory_space<vmem>>, vector<1x32x1xf32>
      %61 = vector.shape_cast %60 : vector<1x32x1xf32> to vector<32x1xf32>
      %62 = arith.maximumf %61, %59 : vector<32x1xf32>
      %c256_i32_30 = arith.constant 256 : i32
      %63 = vector.broadcast %c256_i32_30 : i32 to vector<1x128xi32>
      %64 = arith.cmpi sge, %13, %63 : vector<1x128xi32>
      %c520_i32 = arith.constant 520 : i32
      %65 = vector.broadcast %c520_i32 : i32 to vector<1x128xi32>
      %66 = arith.cmpi slt, %13, %65 : vector<1x128xi32>
      %67 = arith.andi %64, %66 : vector<1x128xi1>
      %cst_31 = arith.constant 0xFF800000 : f32
      %68 = vector.shape_cast %67 : vector<1x128xi1> to vector<1x128xi1>
      %69 = vector.broadcast %68 : vector<1x128xi1> to vector<32x128xi1>
      %70 = vector.broadcast %cst_31 : f32 to vector<32x128xf32>
      %71 = arith.select %69, %9, %70 : vector<32x128xi1>, vector<32x128xf32>
      %cst_32 = arith.constant dense<0xFF800000> : vector<32xf32>
      %72 = vector.multi_reduction <maximumf>, %71, %cst_32 [1] : vector<32x128xf32> to vector<32xf32>
      %73 = vector.shape_cast %72 : vector<32xf32> to vector<32x1xf32>
      %c2 = arith.constant 2 : index
      %c0_33 = arith.constant 0 : index
      %c0_34 = arith.constant 0 : index
      %74 = vector.load %arg10[%c2, %c0_33, %c0_34] : memref<3x32x1xf32, #tpu.memory_space<vmem>>, vector<1x32x1xf32>
      %75 = vector.shape_cast %74 : vector<1x32x1xf32> to vector<32x1xf32>
      %76 = arith.maximumf %75, %73 : vector<32x1xf32>
      %cst_35 = arith.constant 0.000000e+00 : f32
      %77 = vector.shape_cast %39 : vector<1x128xi1> to vector<1x128xi1>
      %78 = vector.broadcast %77 : vector<1x128xi1> to vector<32x128xi1>
      %79 = vector.shape_cast %48 : vector<32x1xf32> to vector<32x1xf32>
      %80 = vector.broadcast %79 : vector<32x1xf32> to vector<32x128xf32>
      %81 = vector.broadcast %cst_35 : f32 to vector<32x128xf32>
      %82 = arith.select %78, %80, %81 : vector<32x128xi1>, vector<32x128xf32>
      %83 = vector.shape_cast %53 : vector<1x128xi1> to vector<1x128xi1>
      %84 = vector.broadcast %83 : vector<1x128xi1> to vector<32x128xi1>
      %85 = vector.shape_cast %62 : vector<32x1xf32> to vector<32x1xf32>
      %86 = vector.broadcast %85 : vector<32x1xf32> to vector<32x128xf32>
      %87 = arith.select %84, %86, %82 : vector<32x128xi1>, vector<32x128xf32>
      %88 = arith.ori %39, %53 : vector<1x128xi1>
      %89 = vector.shape_cast %67 : vector<1x128xi1> to vector<1x128xi1>
      %90 = vector.broadcast %89 : vector<1x128xi1> to vector<32x128xi1>
      %91 = vector.shape_cast %76 : vector<32x1xf32> to vector<32x1xf32>
      %92 = vector.broadcast %91 : vector<32x1xf32> to vector<32x128xf32>
      %93 = arith.select %90, %92, %87 : vector<32x128xi1>, vector<32x128xf32>
      %94 = arith.ori %88, %67 : vector<1x128xi1>
      %95 = arith.subf %9, %93 : vector<32x128xf32>
      %96 = math.exp %95 : vector<32x128xf32>
      %cst_36 = arith.constant 0.000000e+00 : f32
      %97 = vector.shape_cast %94 : vector<1x128xi1> to vector<1x128xi1>
      %98 = vector.broadcast %97 : vector<1x128xi1> to vector<32x128xi1>
      %99 = vector.broadcast %cst_36 : f32 to vector<32x128xf32>
      %100 = arith.select %98, %96, %99 : vector<32x128xi1>, vector<32x128xf32>
      %cst_37 = arith.constant 0.000000e+00 : f32
      %101 = vector.shape_cast %39 : vector<1x128xi1> to vector<1x128xi1>
      %102 = vector.broadcast %101 : vector<1x128xi1> to vector<32x128xi1>
      %103 = vector.broadcast %cst_37 : f32 to vector<32x128xf32>
      %104 = arith.select %102, %100, %103 : vector<32x128xi1>, vector<32x128xf32>
      %cst_38 = arith.constant dense<0.000000e+00> : vector<32xf32>
      %105 = vector.multi_reduction <add>, %104, %cst_38 [1] : vector<32x128xf32> to vector<32xf32>
      %106 = vector.shape_cast %105 : vector<32xf32> to vector<32x1xf32>
      %cst_39 = arith.constant 0xFF800000 : f32
      %107 = vector.broadcast %cst_39 : f32 to vector<32x1xf32>
      %108 = arith.cmpf oeq, %48, %107 : vector<32x1xf32>
      %109 = arith.subf %47, %48 : vector<32x1xf32>
      %110 = math.exp %109 : vector<32x1xf32>
      %cst_40 = arith.constant 0.000000e+00 : f32
      %111 = vector.broadcast %cst_40 : f32 to vector<32x1xf32>
      %112 = arith.select %108, %111, %110 : vector<32x1xi1>, vector<32x1xf32>
      %c0_41 = arith.constant 0 : index
      %c0_42 = arith.constant 0 : index
      %c0_43 = arith.constant 0 : index
      %113 = vector.load %arg11[%c0_41, %c0_42, %c0_43] : memref<3x32x1xf32, #tpu.memory_space<vmem>>, vector<1x32x1xf32>
      %114 = vector.shape_cast %113 : vector<1x32x1xf32> to vector<32x1xf32>
      %115 = arith.mulf %112, %114 : vector<32x1xf32>
      %116 = arith.addf %115, %106 : vector<32x1xf32>
      %c0_44 = arith.constant 0 : index
      %c0_45 = arith.constant 0 : index
      %c0_46 = arith.constant 0 : index
      %117 = vector.load %arg11[%c0_44, %c0_45, %c0_46] : memref<3x32x1xf32, #tpu.memory_space<vmem>>, vector<1x32x1xf32>
      %118 = vector.shape_cast %117 : vector<1x32x1xf32> to vector<32x1xf32>
      %119 = vector.shape_cast %116 : vector<32x1xf32> to vector<1x32x1xf32>
      tpu.vector_store %arg11[%c0_44, %c0_45, %c0_46], %119 {strides = array<i32>} : memref<3x32x1xf32, #tpu.memory_space<vmem>>, vector<1x32x1xf32>,
      %c0_47 = arith.constant 0 : index
      %c0_48 = arith.constant 0 : index
      %c0_49 = arith.constant 0 : index
      %120 = vector.load %arg10[%c0_47, %c0_48, %c0_49] : memref<3x32x1xf32, #tpu.memory_space<vmem>>, vector<1x32x1xf32>
      %121 = vector.shape_cast %120 : vector<1x32x1xf32> to vector<32x1xf32>
      %122 = vector.shape_cast %48 : vector<32x1xf32> to vector<1x32x1xf32>
      tpu.vector_store %arg10[%c0_47, %c0_48, %c0_49], %122 {strides = array<i32>} : memref<3x32x1xf32, #tpu.memory_space<vmem>>, vector<1x32x1xf32>,
      %cst_50 = arith.constant 0.000000e+00 : f32
      %123 = vector.shape_cast %53 : vector<1x128xi1> to vector<1x128xi1>
      %124 = vector.broadcast %123 : vector<1x128xi1> to vector<32x128xi1>
      %125 = vector.broadcast %cst_50 : f32 to vector<32x128xf32>
      %126 = arith.select %124, %100, %125 : vector<32x128xi1>, vector<32x128xf32>
      %cst_51 = arith.constant dense<0.000000e+00> : vector<32xf32>
      %127 = vector.multi_reduction <add>, %126, %cst_51 [1] : vector<32x128xf32> to vector<32xf32>
      %128 = vector.shape_cast %127 : vector<32xf32> to vector<32x1xf32>
      %cst_52 = arith.constant 0xFF800000 : f32
      %129 = vector.broadcast %cst_52 : f32 to vector<32x1xf32>
      %130 = arith.cmpf oeq, %62, %129 : vector<32x1xf32>
      %131 = arith.subf %61, %62 : vector<32x1xf32>
      %132 = math.exp %131 : vector<32x1xf32>
      %cst_53 = arith.constant 0.000000e+00 : f32
      %133 = vector.broadcast %cst_53 : f32 to vector<32x1xf32>
      %134 = arith.select %130, %133, %132 : vector<32x1xi1>, vector<32x1xf32>
      %c1_54 = arith.constant 1 : index
      %c0_55 = arith.constant 0 : index
      %c0_56 = arith.constant 0 : index
      %135 = vector.load %arg11[%c1_54, %c0_55, %c0_56] : memref<3x32x1xf32, #tpu.memory_space<vmem>>, vector<1x32x1xf32>
      %136 = vector.shape_cast %135 : vector<1x32x1xf32> to vector<32x1xf32>
      %137 = arith.mulf %134, %136 : vector<32x1xf32>
      %138 = arith.addf %137, %128 : vector<32x1xf32>
      %c1_57 = arith.constant 1 : index
      %c0_58 = arith.constant 0 : index
      %c0_59 = arith.constant 0 : index
      %139 = vector.load %arg11[%c1_57, %c0_58, %c0_59] : memref<3x32x1xf32, #tpu.memory_space<vmem>>, vector<1x32x1xf32>
      %140 = vector.shape_cast %139 : vector<1x32x1xf32> to vector<32x1xf32>
      %141 = vector.shape_cast %138 : vector<32x1xf32> to vector<1x32x1xf32>
      tpu.vector_store %arg11[%c1_57, %c0_58, %c0_59], %141 {strides = array<i32>} : memref<3x32x1xf32, #tpu.memory_space<vmem>>, vector<1x32x1xf32>,
      %c1_60 = arith.constant 1 : index
      %c0_61 = arith.constant 0 : index
      %c0_62 = arith.constant 0 : index
      %142 = vector.load %arg10[%c1_60, %c0_61, %c0_62] : memref<3x32x1xf32, #tpu.memory_space<vmem>>, vector<1x32x1xf32>
      %143 = vector.shape_cast %142 : vector<1x32x1xf32> to vector<32x1xf32>
      %144 = vector.shape_cast %62 : vector<32x1xf32> to vector<1x32x1xf32>
      tpu.vector_store %arg10[%c1_60, %c0_61, %c0_62], %144 {strides = array<i32>} : memref<3x32x1xf32, #tpu.memory_space<vmem>>, vector<1x32x1xf32>,
      %cst_63 = arith.constant 0.000000e+00 : f32
      %145 = vector.shape_cast %67 : vector<1x128xi1> to vector<1x128xi1>
      %146 = vector.broadcast %145 : vector<1x128xi1> to vector<32x128xi1>
      %147 = vector.broadcast %cst_63 : f32 to vector<32x128xf32>
      %148 = arith.select %146, %100, %147 : vector<32x128xi1>, vector<32x128xf32>
      %cst_64 = arith.constant dense<0.000000e+00> : vector<32xf32>
      %149 = vector.multi_reduction <add>, %148, %cst_64 [1] : vector<32x128xf32> to vector<32xf32>
      %150 = vector.shape_cast %149 : vector<32xf32> to vector<32x1xf32>
      %cst_65 = arith.constant 0xFF800000 : f32
      %151 = vector.broadcast %cst_65 : f32 to vector<32x1xf32>
      %152 = arith.cmpf oeq, %76, %151 : vector<32x1xf32>
      %153 = arith.subf %75, %76 : vector<32x1xf32>
      %154 = math.exp %153 : vector<32x1xf32>
      %cst_66 = arith.constant 0.000000e+00 : f32
      %155 = vector.broadcast %cst_66 : f32 to vector<32x1xf32>
      %156 = arith.select %152, %155, %154 : vector<32x1xi1>, vector<32x1xf32>
      %c2_67 = arith.constant 2 : index
      %c0_68 = arith.constant 0 : index
      %c0_69 = arith.constant 0 : index
      %157 = vector.load %arg11[%c2_67, %c0_68, %c0_69] : memref<3x32x1xf32, #tpu.memory_space<vmem>>, vector<1x32x1xf32>
      %158 = vector.shape_cast %157 : vector<1x32x1xf32> to vector<32x1xf32>
      %159 = arith.mulf %156, %158 : vector<32x1xf32>
      %160 = arith.addf %159, %150 : vector<32x1xf32>
      %c2_70 = arith.constant 2 : index
      %c0_71 = arith.constant 0 : index
      %c0_72 = arith.constant 0 : index
      %161 = vector.load %arg11[%c2_70, %c0_71, %c0_72] : memref<3x32x1xf32, #tpu.memory_space<vmem>>, vector<1x32x1xf32>
      %162 = vector.shape_cast %161 : vector<1x32x1xf32> to vector<32x1xf32>
      %163 = vector.shape_cast %160 : vector<32x1xf32> to vector<1x32x1xf32>
      tpu.vector_store %arg11[%c2_70, %c0_71, %c0_72], %163 {strides = array<i32>} : memref<3x32x1xf32, #tpu.memory_space<vmem>>, vector<1x32x1xf32>,
      %c2_73 = arith.constant 2 : index
      %c0_74 = arith.constant 0 : index
      %c0_75 = arith.constant 0 : index
      %164 = vector.load %arg10[%c2_73, %c0_74, %c0_75] : memref<3x32x1xf32, #tpu.memory_space<vmem>>, vector<1x32x1xf32>
      %165 = vector.shape_cast %164 : vector<1x32x1xf32> to vector<32x1xf32>
      %166 = vector.shape_cast %76 : vector<32x1xf32> to vector<1x32x1xf32>
      tpu.vector_store %arg10[%c2_73, %c0_74, %c0_75], %166 {strides = array<i32>} : memref<3x32x1xf32, #tpu.memory_space<vmem>>, vector<1x32x1xf32>,
    } else {
    }
    %c4_i32 = arith.constant 4 : i32
    %32 = arith.cmpi eq, %arg1, %c4_i32 : i32
    %33 = arith.extui %32 : i1 to i32
    %c0_i32_18 = arith.constant 0 : i32
    %34 = arith.cmpi ne, %33, %c0_i32_18 : i32
    scf.if %34 {
      %c0_i32_19 = arith.constant 0 : i32
      %35 = vector.broadcast %c0_i32_19 : i32 to vector<32x1xi32>
      %c100_i32 = arith.constant 100 : i32
      %36 = vector.broadcast %c100_i32 : i32 to vector<32x1xi32>
      %37 = arith.cmpi sge, %1, %36 : vector<32x1xi32>
      %38 = arith.extui %37 : vector<32x1xi1> to vector<32x1xi32>
      %39 = arith.addi %35, %38 : vector<32x1xi32>
      %c256_i32 = arith.constant 256 : i32
      %40 = vector.broadcast %c256_i32 : i32 to vector<32x1xi32>
      %41 = arith.cmpi sge, %1, %40 : vector<32x1xi32>
      %42 = arith.extui %41 : vector<32x1xi1> to vector<32x1xi32>
      %43 = arith.addi %39, %42 : vector<32x1xi32>
      %cst_20 = arith.constant 0.000000e+00 : f32
      %44 = vector.broadcast %cst_20 : f32 to vector<32x1xf32>
      %cst_21 = arith.constant 1.000000e+00 : f32
      %45 = vector.broadcast %cst_21 : f32 to vector<32x1xf32>
      %c0_i32_22 = arith.constant 0 : i32
      %46 = vector.broadcast %c0_i32_22 : i32 to vector<32x1xi32>
      %47 = arith.cmpi eq, %43, %46 : vector<32x1xi32>
      %c0_23 = arith.constant 0 : index
      %c0_24 = arith.constant 0 : index
      %c0_25 = arith.constant 0 : index
      %48 = vector.load %arg10[%c0_23, %c0_24, %c0_25] : memref<3x32x1xf32, #tpu.memory_space<vmem>>, vector<1x32x1xf32>
      %49 = vector.shape_cast %48 : vector<1x32x1xf32> to vector<32x1xf32>
      %50 = arith.select %47, %49, %44 : vector<32x1xi1>, vector<32x1xf32>
      %c0_26 = arith.constant 0 : index
      %c0_27 = arith.constant 0 : index
      %c0_28 = arith.constant 0 : index
      %51 = vector.load %arg11[%c0_26, %c0_27, %c0_28] : memref<3x32x1xf32, #tpu.memory_space<vmem>>, vector<1x32x1xf32>
      %52 = vector.shape_cast %51 : vector<1x32x1xf32> to vector<32x1xf32>
      %53 = arith.select %47, %52, %45 : vector<32x1xi1>, vector<32x1xf32>
      %c1_i32 = arith.constant 1 : i32
      %54 = vector.broadcast %c1_i32 : i32 to vector<32x1xi32>
      %55 = arith.cmpi eq, %43, %54 : vector<32x1xi32>
      %c1 = arith.constant 1 : index
      %c0_29 = arith.constant 0 : index
      %c0_30 = arith.constant 0 : index
      %56 = vector.load %arg10[%c1, %c0_29, %c0_30] : memref<3x32x1xf32, #tpu.memory_space<vmem>>, vector<1x32x1xf32>
      %57 = vector.shape_cast %56 : vector<1x32x1xf32> to vector<32x1xf32>
      %58 = arith.select %55, %57, %50 : vector<32x1xi1>, vector<32x1xf32>
      %c1_31 = arith.constant 1 : index
      %c0_32 = arith.constant 0 : index
      %c0_33 = arith.constant 0 : index
      %59 = vector.load %arg11[%c1_31, %c0_32, %c0_33] : memref<3x32x1xf32, #tpu.memory_space<vmem>>, vector<1x32x1xf32>
      %60 = vector.shape_cast %59 : vector<1x32x1xf32> to vector<32x1xf32>
      %61 = arith.select %55, %60, %53 : vector<32x1xi1>, vector<32x1xf32>
      %c2_i32 = arith.constant 2 : i32
      %62 = vector.broadcast %c2_i32 : i32 to vector<32x1xi32>
      %63 = arith.cmpi eq, %43, %62 : vector<32x1xi32>
      %c2 = arith.constant 2 : index
      %c0_34 = arith.constant 0 : index
      %c0_35 = arith.constant 0 : index
      %64 = vector.load %arg10[%c2, %c0_34, %c0_35] : memref<3x32x1xf32, #tpu.memory_space<vmem>>, vector<1x32x1xf32>
      %65 = vector.shape_cast %64 : vector<1x32x1xf32> to vector<32x1xf32>
      %66 = arith.select %63, %65, %58 : vector<32x1xi1>, vector<32x1xf32>
      %c2_36 = arith.constant 2 : index
      %c0_37 = arith.constant 0 : index
      %c0_38 = arith.constant 0 : index
      %67 = vector.load %arg11[%c2_36, %c0_37, %c0_38] : memref<3x32x1xf32, #tpu.memory_space<vmem>>, vector<1x32x1xf32>
      %68 = vector.shape_cast %67 : vector<1x32x1xf32> to vector<32x1xf32>
      %69 = arith.select %63, %68, %61 : vector<32x1xi1>, vector<32x1xf32>
      %c0_39 = arith.constant 0 : index
      %c0_40 = arith.constant 0 : index
      %70 = vector.load %arg12[%c0_39, %c0_40] : memref<32x1xf32, #tpu.memory_space<vmem>>, vector<32x1xf32>
      %71 = arith.subf %70, %66 : vector<32x1xf32>
      %72 = math.log %69 : vector<32x1xf32>
      %73 = arith.subf %71, %72 : vector<32x1xf32>
      %c0_41 = arith.constant 0 : index
      %c0_42 = arith.constant 0 : index
      %74 = vector.load %arg13[%c0_41, %c0_42] : memref<32x2xf32, #tpu.memory_space<vmem>>, vector<32x2xf32>
      %c0_43 = arith.constant 0 : index
      %c0_44 = arith.constant 0 : index
      %c0_45 = arith.constant 0 : index
      %75 = vector.load %arg10[%c0_43, %c0_44, %c0_45] : memref<3x32x1xf32, #tpu.memory_space<vmem>>, vector<1x32x1xf32>
      %76 = vector.shape_cast %75 : vector<1x32x1xf32> to vector<32x1xf32>
      %77 = vector.broadcast %76 : vector<32x1xf32> to vector<32x2xf32>
      %78 = arith.subf %74, %77 : vector<32x2xf32>
      %c0_46 = arith.constant 0 : index
      %c0_47 = arith.constant 0 : index
      %c0_48 = arith.constant 0 : index
      %79 = vector.load %arg11[%c0_46, %c0_47, %c0_48] : memref<3x32x1xf32, #tpu.memory_space<vmem>>, vector<1x32x1xf32>
      %80 = vector.shape_cast %79 : vector<1x32x1xf32> to vector<32x1xf32>
      %81 = math.log %80 : vector<32x1xf32>
      %82 = vector.broadcast %81 : vector<32x1xf32> to vector<32x2xf32>
      %83 = arith.subf %78, %82 : vector<32x2xf32>
      %cst_49 = arith.constant 0.000000e+00 : f32
      %84 = vector.broadcast %cst_49 : f32 to vector<32x1xf32>
      %c1_i32_50 = arith.constant 1 : i32
      %85 = vector.broadcast %c1_i32_50 : i32 to vector<32x1xi32>
      %86 = arith.cmpi eq, %43, %85 : vector<32x1xi32>
      %87 = vector.extract_strided_slice %83 {offsets = [0, 1], sizes = [32, 1], strides = [1, 1]} : vector<32x2xf32> to vector<32x1xf32>
      %cst_51 = arith.constant 0.000000e+00 : f32
      %88 = vector.broadcast %cst_51 : f32 to vector<32x1xf32>
      %89 = arith.select %86, %87, %88 : vector<32x1xi1>, vector<32x1xf32>
      %90 = arith.addf %84, %89 : vector<32x1xf32>
      %c2_i32_52 = arith.constant 2 : i32
      %91 = vector.broadcast %c2_i32_52 : i32 to vector<32x1xi32>
      %92 = arith.cmpi eq, %43, %91 : vector<32x1xi32>
      %93 = vector.extract_strided_slice %83 {offsets = [0, 0], sizes = [32, 1], strides = [1, 1]} : vector<32x2xf32> to vector<32x1xf32>
      %cst_53 = arith.constant 0.000000e+00 : f32
      %94 = vector.broadcast %cst_53 : f32 to vector<32x1xf32>
      %95 = arith.select %92, %93, %94 : vector<32x1xi1>, vector<32x1xf32>
      %96 = arith.addf %90, %95 : vector<32x1xf32>
      %97 = arith.addf %73, %96 : vector<32x1xf32>
      %cst_54 = arith.constant 0.000000e+00 : f32
      %98 = vector.broadcast %cst_54 : f32 to vector<32x1xf32>
      %99 = arith.subf %98, %97 : vector<32x1xf32>
      %c32_i32 = arith.constant 32 : i32
      %100 = arith.muli %arg0, %c32_i32 : i32
      %101 = tpu.iota {dimensions = array<i32: 0>} : vector<32x1xi32>
      %102 = vector.broadcast %100 : i32 to vector<32x1xi32>
      %103 = arith.addi %102, %101 : vector<32x1xi32>
      %c70_i32 = arith.constant 70 : i32
      %104 = vector.broadcast %c70_i32 : i32 to vector<32x1xi32>
      %105 = arith.cmpi slt, %103, %104 : vector<32x1xi32>
      %cst_55 = arith.constant 0.000000e+00 : f32
      %106 = vector.broadcast %cst_55 : f32 to vector<32x1xf32>
      %107 = arith.select %105, %99, %106 : vector<32x1xi1>, vector<32x1xf32>
      %c0_56 = arith.constant 0 : index
      %c0_57 = arith.constant 0 : index
      %108 = vector.load %arg9[%c0_56, %c0_57] : memref<32x1xf32, #tpu.memory_space<vmem>>, vector<32x1xf32>
      tpu.vector_store %arg9[%c0_56, %c0_57], %107 {strides = array<i32>} : memref<32x1xf32, #tpu.memory_space<vmem>>, vector<32x1xf32>,
    } else {
    }
    return
  }
  func.func @transform_0(%arg0: i32, %arg1: i32, %arg2: memref<5xi32, #tpu.memory_space<smem>>) -> (i32, i32) {
    %c0_i32 = arith.constant 0 : i32
    %c0_i32_0 = arith.constant 0 : i32
    return %arg0, %c0_i32 : i32, i32
  }
  func.func @transform_1(%arg0: i32, %arg1: i32, %arg2: memref<5xi32, #tpu.memory_space<smem>>) -> (i32, i32) {
    %c0_i32 = arith.constant 0 : i32
    %c0_i32_0 = arith.constant 0 : i32
    return %arg1, %c0_i32 : i32, i32
  }
  func.func @transform_2(%arg0: i32, %arg1: i32, %arg2: memref<5xi32, #tpu.memory_space<smem>>) -> (i32, i32) {
    %c0_i32 = arith.constant 0 : i32
    %c0_i32_0 = arith.constant 0 : i32
    return %c0_i32, %arg1 : i32, i32
  }
  func.func @transform_3(%arg0: i32, %arg1: i32, %arg2: memref<5xi32, #tpu.memory_space<smem>>) -> (i32, i32) {
    %c0_i32 = arith.constant 0 : i32
    %c0_i32_0 = arith.constant 0 : i32
    %c0_i32_1 = arith.constant 0 : i32
    return %c0_i32, %c0_i32_0 : i32, i32
  }
  func.func @transform_4(%arg0: i32, %arg1: i32, %arg2: memref<5xi32, #tpu.memory_space<smem>>) -> (i32, i32) {
    %c0_i32 = arith.constant 0 : i32
    %c0_i32_0 = arith.constant 0 : i32
    %c0_i32_1 = arith.constant 0 : i32
    return %c0_i32, %c0_i32_0 : i32, i32
  }
  func.func @transform_5(%arg0: i32, %arg1: i32, %arg2: memref<5xi32, #tpu.memory_space<smem>>) -> (i32, i32) {
    %c0_i32 = arith.constant 0 : i32
    %c0_i32_0 = arith.constant 0 : i32
    return %arg0, %c0_i32 : i32, i32
  }
  func.func @transform_6(%arg0: i32, %arg1: i32, %arg2: memref<5xi32, #tpu.memory_space<smem>>) -> (i32, i32) {
    %c0_i32 = arith.constant 0 : i32
    %c0_i32_0 = arith.constant 0 : i32
    return %arg0, %c0_i32 : i32, i32
  }
}

</mosaic_0001>

<llo_original>
// kernel: tpu_custom_call.1
$region0: #{tpu_custom_call.1}
  #allocation0 [shape = 'u32[]', space=smem, size = 0x4, offset = 0x4, fixed_abs, tag = 'smem constant byte address 0x4 - core index']
  #allocation1 [shape = 'u32[144,128]{1,0:T(1,128)}', space=vmem, size = 0x12000, scoped, tag = 'internal scratch']
  #allocation2 [shape = 'f32[3,32,1]{2,1,0:T(8,128)}', space=vmem, size = 0xc000, scoped, tag = 'scratch operand']
  #allocation3 [shape = 'f32[3,32,1]{2,1,0:T(8,128)}', space=vmem, size = 0xc000, scoped, tag = 'scratch operand']
  #allocation4 [shape = 'f32[32,1]{1,0:T(8,128)}', space=vmem, size = 0x4000, scoped, tag = 'scratch operand']
  #allocation5 [shape = 'f32[32,2]{1,0:T(8,128)}', space=vmem, size = 0x4000, scoped, tag = 'scratch operand']
  #allocation6 [shape = 's32[1]{0}', space=sflag, size = 0x4, scoped, tag = 'scoped memory for tpu_custom_call.1']
  #allocation7 [shape = 'u8[512]{0}', space=smem, size = 0x200, scoped, tag = 'prefetched SMEM operand 0']
  %s0 = inlined_call_operand.vmem [shape: s32[5], index: 0, kind: input, shape index: {}]
  %s1 = inlined_call_operand.vmem [shape: f32[70,64], index: 1, kind: input, shape index: {}]
  %s2 = inlined_call_operand.vmem [shape: f32[520,64], index: 2, kind: input, shape index: {}]
  %s3 = inlined_call_operand.vmem [shape: f32[1,520], index: 3, kind: input, shape index: {}]
  %s4 = inlined_call_operand.vmem [shape: f32[2,64], index: 4, kind: input, shape index: {}]
  %s5 = inlined_call_operand.vmem [shape: f32[1,2], index: 5, kind: input, shape index: {}]
  %s6 = inlined_call_operand.vmem [shape: s32[70,1], index: 6, kind: input, shape index: {}]
  %s7 = inlined_call_operand.vmem [shape: f32[70,1], index: 7, kind: output, shape index: {}]
  %s8 = sld [smem:[#allocation0]]
  $region121: #{tpu_custom_call.1} parent=0
    _
  %s10 = ssub.s32 1, %s8
  %s11 = scalar_select 0, %s10, %s8
  %s12 = sshll.u32 %s0, 4
  %s13 = int_to_ptr.vmem [resolvable:$true] %s12
  %15 = dma.vmem_to_smem %s13, 16, [#allocation7], [#allocation6]
  %16 = dma.done [#allocation6], 16
  %17 = sfence
  $region1: #{tpu_custom_call.1} parent=0
    #allocation8 [shape = 'u8[32768]{0}', space=vmem, size = 0x8000, scoped, tag = 'output window, operand 0']
    loop: start=0, step=1, limit=17
    $region2: #{tpu_custom_call.1} parent=1 // loop_pre_header
      _
    $region3: #{tpu_custom_call.1} parent=1 // loop_header
      %s19 = sphi 0, %s23
      %p20 = scmp.ge.s32.totalorder %s19, 17
      %s26 = sphi 0, %s38
      %s27 = sphi 0, %s34
      %s28 = sphi 0, %s26
      %s29 = sphi 0, %s27
      %s30 = sphi 0, %s28
      %s31 = sphi 0, %s29
      %s41 = sphi 0, %s43
      %s44 = sphi 0, %s41
      %s45 = sphi 0, %s44
      %s61 = sphi 0, %s45
      %s67 = sphi 0, %s69
      %s70 = sphi 0, %s67
      %s71 = sphi 0, %s70
      %s87 = sphi 0, %s71
      %s93 = sphi 0, %s95
      %s96 = sphi 0, %s93
      %s97 = sphi 0, %s96
      %s113 = sphi 0, %s97
      %s117 = sphi 0, %s117
      %s119 = sphi 0, %s117
      %s120 = sphi 0, %s119
      %s134 = sphi 0, %s120
      %s138 = sphi 0, %s138
      %s140 = sphi 0, %s138
      %s141 = sphi 0, %s140
      %s155 = sphi 0, %s141
      %s161 = sphi 0, %s163
      %s164 = sphi 0, %s161
      %s165 = sphi 0, %s164
      %s181 = sphi 0, %s165
      %s187 = sphi 0, %s189
      %s190 = sphi 0, %s187
      %s191 = sphi 0, %s190
      %s207 = sphi 0, %s191
    $region4: #{tpu_custom_call.1} parent=1 // loop_header_branch
      %22 = sbr.rel (%p20) target = $region8
    $region5: #{tpu_custom_call.1} parent=1 // loop_body
      %s24 = ssub.s32 %s19, 1
      %s25 = ssub.s32 %s19, 2
      %s32 = sadd.s32 1, %s27
      %p33 = scmp.ge.s32.totalorder %s32, 5
      %s34 = scalar_select %p33, 0, %s32
      %s35 = sadd.s32 1, %s26
      %s36 = scalar_select %p33, %s35, %s26
      %p37 = scmp.ge.s32.totalorder %s36, 3
      %s38 = scalar_select %p37, 0, %s36
      %s39 = ssub.s32 %s26, %s38
      %p40 = scmp.eq.s32.totalorder %s39, 0
      %s42 = sadd.s32 %s41, 1
      %s43 = scalar_select %p40, %s41, %s42
      %p46 = pneg %p40
      %p47 = scmp.eq.s32.totalorder %s19, 14
      %p48 = por %p46, %p47
      %p49 = scmp.ne.s32.totalorder %s41, %s44
      %p50 = scmp.eq.s32.totalorder %s19, 0
      %p51 = por %p49, %p50
      %p52 = scmp.ne.s32.totalorder %s41, %s44
      %p53 = scmp.eq.s32.totalorder %s24, 14
      %p54 = por %p52, %p53
      %p55 = scmp.ne.s32.totalorder %s44, %s45
      %p56 = scmp.eq.s32.totalorder %s24, 0
      %p57 = por %p55, %p56
      %p58 = scmp.ne.s32.totalorder %s44, %s45
      %p59 = scmp.eq.s32.totalorder %s25, 14
      %p60 = por %p58, %p59
      %p62 = scmp.ne.s32.totalorder %s45, %s61
      %p63 = scmp.eq.s32.totalorder %s25, 0
      %p64 = por %p62, %p63
      %s65 = ssub.s32 %s27, %s34
      %p66 = scmp.eq.s32.totalorder %s65, 0
      %s68 = sadd.s32 %s67, 1
      %s69 = scalar_select %p66, %s67, %s68
      %p72 = pneg %p66
      %p73 = scmp.eq.s32.totalorder %s19, 14
      %p74 = por %p72, %p73
      %p75 = scmp.ne.s32.totalorder %s67, %s70
      %p76 = scmp.eq.s32.totalorder %s19, 0
      %p77 = por %p75, %p76
      %p78 = scmp.ne.s32.totalorder %s67, %s70
      %p79 = scmp.eq.s32.totalorder %s24, 14
      %p80 = por %p78, %p79
      %p81 = scmp.ne.s32.totalorder %s70, %s71
      %p82 = scmp.eq.s32.totalorder %s24, 0
      %p83 = por %p81, %p82
      %p84 = scmp.ne.s32.totalorder %s70, %s71
      %p85 = scmp.eq.s32.totalorder %s25, 14
      %p86 = por %p84, %p85
      %p88 = scmp.ne.s32.totalorder %s71, %s87
      %p89 = scmp.eq.s32.totalorder %s25, 0
      %p90 = por %p88, %p89
      %s91 = ssub.s32 %s27, %s34
      %p92 = scmp.eq.s32.totalorder %s91, 0
      %s94 = sadd.s32 %s93, 1
      %s95 = scalar_select %p92, %s93, %s94
      %p98 = pneg %p92
      %p99 = scmp.eq.s32.totalorder %s19, 14
      %p100 = por %p98, %p99
      %p101 = scmp.ne.s32.totalorder %s93, %s96
      %p102 = scmp.eq.s32.totalorder %s19, 0
      %p103 = por %p101, %p102
      %p104 = scmp.ne.s32.totalorder %s93, %s96
      %p105 = scmp.eq.s32.totalorder %s24, 14
      %p106 = por %p104, %p105
      %p107 = scmp.ne.s32.totalorder %s96, %s97
      %p108 = scmp.eq.s32.totalorder %s24, 0
      %p109 = por %p107, %p108
      %p110 = scmp.ne.s32.totalorder %s96, %s97
      %p111 = scmp.eq.s32.totalorder %s25, 14
      %p112 = por %p110, %p111
      %p114 = scmp.ne.s32.totalorder %s97, %s113
      %p115 = scmp.eq.s32.totalorder %s25, 0
      %p116 = por %p114, %p115
      %s118 = sadd.s32 %s117, 1
      %p121 = scmp.eq.s32.totalorder %s19, 14
      %p122 = scmp.ne.s32.totalorder %s117, %s119
      %p123 = scmp.eq.s32.totalorder %s19, 0
      %p124 = por %p122, %p123
      %p125 = scmp.ne.s32.totalorder %s117, %s119
      %p126 = scmp.eq.s32.totalorder %s24, 14
      %p127 = por %p125, %p126
      %p128 = scmp.ne.s32.totalorder %s119, %s120
      %p129 = scmp.eq.s32.totalorder %s24, 0
      %p130 = por %p128, %p129
      %p131 = scmp.ne.s32.totalorder %s119, %s120
      %p132 = scmp.eq.s32.totalorder %s25, 14
      %p133 = por %p131, %p132
      %p135 = scmp.ne.s32.totalorder %s120, %s134
      %p136 = scmp.eq.s32.totalorder %s25, 0
      %p137 = por %p135, %p136
      %s139 = sadd.s32 %s138, 1
      %p142 = scmp.eq.s32.totalorder %s19, 14
      %p143 = scmp.ne.s32.totalorder %s138, %s140
      %p144 = scmp.eq.s32.totalorder %s19, 0
      %p145 = por %p143, %p144
      %p146 = scmp.ne.s32.totalorder %s138, %s140
      %p147 = scmp.eq.s32.totalorder %s24, 14
      %p148 = por %p146, %p147
      %p149 = scmp.ne.s32.totalorder %s140, %s141
      %p150 = scmp.eq.s32.totalorder %s24, 0
      %p151 = por %p149, %p150
      %p152 = scmp.ne.s32.totalorder %s140, %s141
      %p153 = scmp.eq.s32.totalorder %s25, 14
      %p154 = por %p152, %p153
      %p156 = scmp.ne.s32.totalorder %s141, %s155
      %p157 = scmp.eq.s32.totalorder %s25, 0
      %p158 = por %p156, %p157
      %s159 = ssub.s32 %s26, %s38
      %p160 = scmp.eq.s32.totalorder %s159, 0
      %s162 = sadd.s32 %s161, 1
      %s163 = scalar_select %p160, %s161, %s162
      %p166 = pneg %p160
      %p167 = scmp.eq.s32.totalorder %s19, 14
      %p168 = por %p166, %p167
      %p169 = scmp.ne.s32.totalorder %s161, %s164
      %p170 = scmp.eq.s32.totalorder %s19, 0
      %p171 = por %p169, %p170
      %p172 = scmp.ne.s32.totalorder %s161, %s164
      %p173 = scmp.eq.s32.totalorder %s24, 14
      %p174 = por %p172, %p173
      %p175 = scmp.ne.s32.totalorder %s164, %s165
      %p176 = scmp.eq.s32.totalorder %s24, 0
      %p177 = por %p175, %p176
      %p178 = scmp.ne.s32.totalorder %s164, %s165
      %p179 = scmp.eq.s32.totalorder %s25, 14
      %p180 = por %p178, %p179
      %p182 = scmp.ne.s32.totalorder %s165, %s181
      %p183 = scmp.eq.s32.totalorder %s25, 0
      %p184 = por %p182, %p183
      %s185 = ssub.s32 %s26, %s38
      %p186 = scmp.eq.s32.totalorder %s185, 0
      %s188 = sadd.s32 %s187, 1
      %s189 = scalar_select %p186, %s187, %s188
      %p192 = pneg %p186
      %p193 = scmp.eq.s32.totalorder %s19, 14
      %p194 = por %p192, %p193
      %p195 = scmp.ne.s32.totalorder %s187, %s190
      %p196 = scmp.eq.s32.totalorder %s19, 0
      %p197 = por %p195, %p196
      %p198 = scmp.ne.s32.totalorder %s187, %s190
      %p199 = scmp.eq.s32.totalorder %s24, 14
      %p200 = por %p198, %p199
      %p201 = scmp.ne.s32.totalorder %s190, %s191
      %p202 = scmp.eq.s32.totalorder %s24, 0
      %p203 = por %p201, %p202
      %p204 = scmp.ne.s32.totalorder %s190, %s191
      %p205 = scmp.eq.s32.totalorder %s25, 14
      %p206 = por %p204, %p205
      %p208 = scmp.ne.s32.totalorder %s191, %s207
      %p209 = scmp.eq.s32.totalorder %s25, 0
      %p210 = por %p208, %p209
      %p211 = scmp.le.s32.totalorder 1, %s19
      %p212 = scmp.lt.s32.totalorder %s19, 16
      %p213 = pnand %p211, %p212
      %p214 = pneg %p213
      // Predicated region
      $region9: #{tpu_custom_call.1} parent=5 // pred_check
        _
      $region10: #{tpu_custom_call.1} parent=5 // pred_check_branch
        %216 = sbr.rel (%p213) target = $region12
      $region11: #{tpu_custom_call.1} parent=5 // pred_region
        %s217 = ssub.s32 %s19, 1
        // Predicated region
        $region13: #{tpu_custom_call.1} parent=11 // pred_check
          %p218 = pneg %p57
        $region14: #{tpu_custom_call.1} parent=11 // pred_check_branch
          %220 = sbr.rel (%p218) target = $region16
        $region15: #{tpu_custom_call.1} parent=11 // pred_region
          %s221 = smul.u32 4, %s28
          %s222 = ssub.s32 9, %s221
          %p223 = scmp.lt.s32.totalorder %s222, 4
          %s224 = scalar_select %p223, %s222, 4
          %s225 = smul.u32 128, %s224
          %p226 = scmp.lt.s32.totalorder %s221, 8
          %s227 = scalar_select %p226, %s221, 8
          %s228 = smul.addr %s227, 8
          %s229 = scalar_lea.vmem %s1, %s228
          %s230 = smul.u32 4, %s28
          %s231 = ssub.s32 9, %s230
          %p232 = scmp.lt.s32.totalorder %s231, 4
          %s233 = scalar_select %p232, %s231, 4
          %s234 = smul.u32 128, %s233
        $region16: #{tpu_custom_call.1} parent=11 // pred_fallthru
          _
        // Predicated region
        $region17: #{tpu_custom_call.1} parent=11 // pred_check
          %p235 = pneg %p130
        $region18: #{tpu_custom_call.1} parent=11 // pred_check_branch
          %237 = sbr.rel (%p235) target = $region20
        $region19: #{tpu_custom_call.1} parent=11 // pred_region
          _
        $region20: #{tpu_custom_call.1} parent=11 // pred_fallthru
          _
        // Predicated region
        $region21: #{tpu_custom_call.1} parent=11 // pred_check
          %p238 = pneg %p151
        $region22: #{tpu_custom_call.1} parent=11 // pred_check_branch
          %240 = sbr.rel (%p238) target = $region24
        $region23: #{tpu_custom_call.1} parent=11 // pred_region
          _
        $region24: #{tpu_custom_call.1} parent=11 // pred_fallthru
          _
      $region12: #{tpu_custom_call.1} parent=5 // pred_fallthru
        _
      %p241 = scmp.lt.s32.totalorder %s19, 15
      // Predicated region
      $region25: #{tpu_custom_call.1} parent=5 // pred_check
        %p242 = pneg %p241
      $region26: #{tpu_custom_call.1} parent=5 // pred_check_branch
        %244 = sbr.rel (%p242) target = $region28
      $region27: #{tpu_custom_call.1} parent=5 // pred_region
        // Predicated region
        $region29: #{tpu_custom_call.1} parent=27 // pred_check
          %p245 = pneg %p77
        $region30: #{tpu_custom_call.1} parent=27 // pred_check_branch
          %247 = sbr.rel (%p245) target = $region32
        $region31: #{tpu_custom_call.1} parent=27 // pred_region
          %s248 = smul.u32 16, %s27
          %s249 = ssub.s32 65, %s248
          %p250 = scmp.lt.s32.totalorder %s249, 16
          %s251 = scalar_select %p250, %s249, 16
          %s252 = smul.u32 128, %s251
          %p253 = scmp.lt.s32.totalorder %s248, 64
          %s254 = scalar_select %p253, %s248, 64
          %s255 = smul.addr %s254, 8
          %s256 = scalar_lea.vmem %s2, %s255
          %s257 = smul.u32 16, %s27
          %s258 = ssub.s32 65, %s257
          %p259 = scmp.lt.s32.totalorder %s258, 16
          %s260 = scalar_select %p259, %s258, 16
          %s261 = smul.u32 128, %s260
        $region32: #{tpu_custom_call.1} parent=27 // pred_fallthru
          _
        // Predicated region
        $region33: #{tpu_custom_call.1} parent=27 // pred_check
          %p262 = pneg %p103
        $region34: #{tpu_custom_call.1} parent=27 // pred_check_branch
          %264 = sbr.rel (%p262) target = $region36
        $region35: #{tpu_custom_call.1} parent=27 // pred_region
          %p265 = scmp.lt.s32.totalorder %s27, 4
          %s266 = scalar_select %p265, %s27, 4
          %s267 = scalar_lea.vmem %s3, %s266
        $region36: #{tpu_custom_call.1} parent=27 // pred_fallthru
          _
        // Predicated region
        $region37: #{tpu_custom_call.1} parent=27 // pred_check
          %p268 = pneg %p171
        $region38: #{tpu_custom_call.1} parent=27 // pred_check_branch
          %270 = sbr.rel (%p268) target = $region40
        $region39: #{tpu_custom_call.1} parent=27 // pred_region
          %s271 = smul.u32 4, %s26
          %s272 = ssub.s32 9, %s271
          %p273 = scmp.lt.s32.totalorder %s272, 4
          %s274 = scalar_select %p273, %s272, 4
          %s275 = smul.u32 128, %s274
          %p276 = scmp.lt.s32.totalorder %s271, 8
          %s277 = scalar_select %p276, %s271, 8
          %s278 = smul.addr %s277, 8
          %s279 = scalar_lea.vmem %s6, %s278
          %s280 = smul.u32 4, %s26
          %s281 = ssub.s32 9, %s280
          %p282 = scmp.lt.s32.totalorder %s281, 4
          %s283 = scalar_select %p282, %s281, 4
          %s284 = smul.u32 128, %s283
        $region40: #{tpu_custom_call.1} parent=27 // pred_fallthru
          _
      $region28: #{tpu_custom_call.1} parent=5 // pred_fallthru
        _
      %p285 = scmp.le.s32.totalorder 1, %s19
      %p286 = scmp.lt.s32.totalorder %s19, 16
      %p287 = pnand %p285, %p286
      %p288 = pneg %p287
      // Predicated region
      $region41: #{tpu_custom_call.1} parent=5 // pred_check
        _
      $region42: #{tpu_custom_call.1} parent=5 // pred_check_branch
        %290 = sbr.rel (%p287) target = $region44
      $region43: #{tpu_custom_call.1} parent=5 // pred_region
        %s291 = ssub.s32 %s19, 1
        %s292 = smul.u32 4, %s28
        %s293 = ssub.s32 9, %s292
        %p294 = scmp.lt.s32.totalorder %s293, 4
        %s295 = scalar_select %p294, %s293, 4
        %s296 = smul.u32 128, %s295
        %p297 = scmp.lt.s32.totalorder %s292, 8
        %s298 = scalar_select %p297, %s292, 8
        %s299 = smul.addr %s298, 8
        %s300 = scalar_lea.vmem %s1, %s299
        %p301 = pneg %p57
        %p302 = pneg %p54
        %s303 = smul.u32 16, %s29
        %s304 = ssub.s32 65, %s303
        %p305 = scmp.lt.s32.totalorder %s304, 16
        %s306 = scalar_select %p305, %s304, 16
        %s307 = smul.u32 128, %s306
        %p308 = scmp.lt.s32.totalorder %s303, 64
        %s309 = scalar_select %p308, %s303, 64
        %s310 = smul.addr %s309, 8
        %s311 = scalar_lea.vmem %s2, %s310
        %p312 = pneg %p83
        %p313 = pneg %p80
        %p314 = scmp.lt.s32.totalorder %s29, 4
        %s315 = scalar_select %p314, %s29, 4
        %s316 = scalar_lea.vmem %s3, %s315
        %p317 = pneg %p109
        %p318 = pneg %p106
        %p319 = pneg %p130
        %p320 = pneg %p127
        %p321 = pneg %p151
        %p322 = pneg %p148
        %s323 = smul.u32 4, %s28
        %s324 = ssub.s32 9, %s323
        %p325 = scmp.lt.s32.totalorder %s324, 4
        %s326 = scalar_select %p325, %s324, 4
        %s327 = smul.u32 128, %s326
        %p328 = scmp.lt.s32.totalorder %s323, 8
        %s329 = scalar_select %p328, %s323, 8
        %s330 = smul.addr %s329, 8
        %s331 = scalar_lea.vmem %s6, %s330
        %p332 = pneg %p177
        %p333 = pneg %p174
        %p334 = pneg %p203
        %p335 = pneg %p200
        %s336 = sand.u32 %s190, 1
        %s337 = sand.u32 %s190, 1
        %s338 = smul.addr %s337, 32
        %s339 = scalar_lea.vmem [#allocation8], %s338
        %s340 = smul.u32 4, %s28
        %s341 = ssub.s32 9, %s340
        %p342 = scmp.lt.s32.totalorder %s341, 4
        %s343 = scalar_select %p342, %s341, 4
        %s344 = smul.u32 128, %s343
        %p345 = scmp.lt.s32.totalorder %s340, 8
        %s346 = scalar_select %p345, %s340, 8
        %s347 = smul.addr %s346, 8
        %s348 = scalar_lea.vmem %s1, %s347
        %s349 = smul.u32 4, %s28
        %s350 = ssub.s32 9, %s349
        %p351 = scmp.lt.s32.totalorder %s350, 4
        %s352 = scalar_select %p351, %s350, 4
        %s353 = smul.u32 128, %s352
        %s354 = smul.u32 16, %s29
        %s355 = ssub.s32 65, %s354
        %p356 = scmp.lt.s32.totalorder %s355, 16
        %s357 = scalar_select %p356, %s355, 16
        %s358 = smul.u32 128, %s357
        %p359 = scmp.lt.s32.totalorder %s354, 64
        %s360 = scalar_select %p359, %s354, 64
        %s361 = smul.addr %s360, 8
        %s362 = scalar_lea.vmem %s2, %s361
        %s363 = smul.u32 16, %s29
        %s364 = ssub.s32 65, %s363
        %p365 = scmp.lt.s32.totalorder %s364, 16
        %s366 = scalar_select %p365, %s364, 16
        %s367 = smul.u32 128, %s366
        %p368 = scmp.lt.s32.totalorder %s29, 4
        %s369 = scalar_select %p368, %s29, 4
        %s370 = scalar_lea.vmem %s3, %s369
        %s371 = smul.u32 4, %s28
        %s372 = ssub.s32 9, %s371
        %p373 = scmp.lt.s32.totalorder %s372, 4
        %s374 = scalar_select %p373, %s372, 4
        %s375 = smul.u32 128, %s374
        %p376 = scmp.lt.s32.totalorder %s371, 8
        %s377 = scalar_select %p376, %s371, 8
        %s378 = smul.addr %s377, 8
        %s379 = scalar_lea.vmem %s6, %s378
        %s380 = smul.u32 4, %s28
        %s381 = ssub.s32 9, %s380
        %p382 = scmp.lt.s32.totalorder %s381, 4
        %s383 = scalar_select %p382, %s381, 4
        %s384 = smul.u32 128, %s383
        %s385 = smul.u32 4, %s28
        %s386 = ssub.s32 9, %s385
        %p387 = scmp.lt.s32.totalorder %s386, 4
        %s388 = scalar_select %p387, %s386, 4
        %s389 = smul.u32 128, %s388
        %v390 = vld [vmem:[%s348] sm:$0xff]
        %v391 = vld [vmem:[%s348 + $0x8] sm:$0xff]
        %v392 = vld [vmem:[%s348 + $0x10] sm:$0xff]
        %v393 = vld [vmem:[%s348 + $0x18] sm:$0xff]
        %v394 = vld [vmem:[%s379] sm:$0xff]
        %v395 = vld [vmem:[%s379 + $0x8] sm:$0xff]
        %v396 = vld [vmem:[%s379 + $0x10] sm:$0xff]
        %v397 = vld [vmem:[%s379 + $0x18] sm:$0xff]
        %p398 = scmp.eq.s32.totalorder %s29, 0
        // Predicated region
        $region45: #{tpu_custom_call.1} parent=43 // pred_check
          %p399 = pneg %p398
        $region46: #{tpu_custom_call.1} parent=43 // pred_check_branch
          %401 = sbr.rel (%p399) target = $region48
        $region47: #{tpu_custom_call.1} parent=43 // pred_region
          %vm402 = vcmask 7168
          %403 = vst.msk [vmem:[#allocation4] sm:$0xff] %vm402, 0.0
          %404 = vst.msk [vmem:[#allocation4 + $0x8] sm:$0xff] %vm402, 0.0
          %405 = vst.msk [vmem:[#allocation4 + $0x10] sm:$0xff] %vm402, 0.0
          %406 = vst.msk [vmem:[#allocation4 + $0x18] sm:$0xff] %vm402, 0.0
          %407 = vst.msk [vmem:[#allocation2] sm:$0xff] %vm402, -inf
          %408 = vst.msk [vmem:[#allocation2 + $0x8] sm:$0xff] %vm402, -inf
          %409 = vst.msk [vmem:[#allocation2 + $0x10] sm:$0xff] %vm402, -inf
          %410 = vst.msk [vmem:[#allocation2 + $0x18] sm:$0xff] %vm402, -inf
          %411 = vst.msk [vmem:[#allocation2 + $0x20] sm:$0xff] %vm402, -inf
          %412 = vst.msk [vmem:[#allocation2 + $0x28] sm:$0xff] %vm402, -inf
          %413 = vst.msk [vmem:[#allocation2 + $0x30] sm:$0xff] %vm402, -inf
          %414 = vst.msk [vmem:[#allocation2 + $0x38] sm:$0xff] %vm402, -inf
          %415 = vst.msk [vmem:[#allocation2 + $0x40] sm:$0xff] %vm402, -inf
          %416 = vst.msk [vmem:[#allocation2 + $0x48] sm:$0xff] %vm402, -inf
          %417 = vst.msk [vmem:[#allocation2 + $0x50] sm:$0xff] %vm402, -inf
          %418 = vst.msk [vmem:[#allocation2 + $0x58] sm:$0xff] %vm402, -inf
          %419 = vst.msk [vmem:[#allocation3] sm:$0xff] %vm402, 0.0
          %420 = vst.msk [vmem:[#allocation3 + $0x8] sm:$0xff] %vm402, 0.0
          %421 = vst.msk [vmem:[#allocation3 + $0x10] sm:$0xff] %vm402, 0.0
          %422 = vst.msk [vmem:[#allocation3 + $0x18] sm:$0xff] %vm402, 0.0
          %423 = vst.msk [vmem:[#allocation3 + $0x20] sm:$0xff] %vm402, 0.0
          %424 = vst.msk [vmem:[#allocation3 + $0x28] sm:$0xff] %vm402, 0.0
          %425 = vst.msk [vmem:[#allocation3 + $0x30] sm:$0xff] %vm402, 0.0
          %426 = vst.msk [vmem:[#allocation3 + $0x38] sm:$0xff] %vm402, 0.0
          %427 = vst.msk [vmem:[#allocation3 + $0x40] sm:$0xff] %vm402, 0.0
          %428 = vst.msk [vmem:[#allocation3 + $0x48] sm:$0xff] %vm402, 0.0
          %429 = vst.msk [vmem:[#allocation3 + $0x50] sm:$0xff] %vm402, 0.0
          %430 = vst.msk [vmem:[#allocation3 + $0x58] sm:$0xff] %vm402, 0.0
          %v431 = vld [vmem:[%s4] sm:$0x3]
          %v432 = vld [vmem:[%s5] sm:$0x1]
          %v434 = vlaneseq
          %v435 = vshrl.u32 %v434, 7
          %v436 = vsub.s32 0, %v435
          %v437 = vrot.slane %v432, %v436
          %vm439 = vcmask 523264
          %v441 = vsel %vm439, %v390, 0
          %v444 = vsel %vm439, %v391, 0
          %v447 = vsel %vm439, %v392, 0
          %v450 = vsel %vm439, %v393, 0
          %v453 = vsel %vm439, %v431, 0
          %455 = vmatprep.subr.mxu0 0.0
          %456 = vmatpush1.xpose.msra.mxu0 %v453
          %457 = vmatprep.subr.mxu0 0.0
          %458 = vmatpush1.xpose.msra.mxu0 0.0
          %459 = vmatprep.subr.mxu0 0.0
          %460 = vmatpush1.xpose.msra.mxu0 0.0
          %461 = vmatprep.subr.mxu0 0.0
          %462 = vmatpush1.xpose.msra.mxu0 0.0
          %463 = vmatprep.subr.mxu0 0.0
          %464 = vmatpush1.xpose.msra.mxu0 0.0
          %465 = vmatprep.subr.mxu0 0.0
          %466 = vmatpush1.xpose.msra.mxu0 0.0
          %467 = vmatprep.subr.mxu0 0.0
          %468 = vmatpush1.xpose.msra.mxu0 0.0
          %469 = vmatprep.subr.mxu0 0.0
          %470 = vmatpush1.xpose.msra.mxu0 0.0
          %471 = vmatprep.subr.mxu0 0.0
          %472 = vmatpush1.xpose.msra.mxu0 0.0
          %473 = vmatprep.subr.mxu0 0.0
          %474 = vmatpush1.xpose.msra.mxu0 0.0
          %475 = vmatprep.subr.mxu0 0.0
          %476 = vmatpush1.xpose.msra.mxu0 0.0
          %477 = vmatprep.subr.mxu0 0.0
          %478 = vmatpush1.xpose.msra.mxu0 0.0
          %479 = vmatprep.subr.mxu0 0.0
          %480 = vmatpush1.xpose.msra.mxu0 0.0
          %481 = vmatprep.subr.mxu0 0.0
          %482 = vmatpush1.xpose.msra.mxu0 0.0
          %483 = vmatprep.subr.mxu0 0.0
          %484 = vmatpush1.xpose.msra.mxu0 0.0
          %485 = vmatprep.subr.mxu0 0.0
          %486 = vmatpush1.xpose.msra.mxu0 0.0
          %487 = vmatprep.subr.mxu0 0.0
          %488 = vmatpush1.xpose.msra.mxu0 0.0
          %489 = vmatprep.subr.mxu0 0.0
          %490 = vmatpush1.xpose.msra.mxu0 0.0
          %491 = vmatprep.subr.mxu0 0.0
          %492 = vmatpush1.xpose.msra.mxu0 0.0
          %493 = vmatprep.subr.mxu0 0.0
          %494 = vmatpush1.xpose.msra.mxu0 0.0
          %495 = vmatprep.subr.mxu0 0.0
          %496 = vmatpush1.xpose.msra.mxu0 0.0
          %497 = vmatprep.subr.mxu0 0.0
          %498 = vmatpush1.xpose.msra.mxu0 0.0
          %499 = vmatprep.subr.mxu0 0.0
          %500 = vmatpush1.xpose.msra.mxu0 0.0
          %501 = vmatprep.subr.mxu0 0.0
          %502 = vmatpush1.xpose.msra.mxu0 0.0
          %503 = vmatprep.subr.mxu0 0.0
          %504 = vmatpush1.xpose.msra.mxu0 0.0
          %505 = vmatprep.subr.mxu0 0.0
          %506 = vmatpush1.xpose.msra.mxu0 0.0
          %507 = vmatprep.subr.mxu0 0.0
          %508 = vmatpush1.xpose.msra.mxu0 0.0
          %509 = vmatprep.subr.mxu0 0.0
          %510 = vmatpush1.xpose.msra.mxu0 0.0
          %511 = vmatprep.subr.mxu0 0.0
          %512 = vmatpush1.xpose.msra.mxu0 0.0
          %513 = vmatprep.subr.mxu0 0.0
          %514 = vmatpush1.xpose.msra.mxu0 0.0
          %515 = vmatprep.subr.mxu0 0.0
          %516 = vmatpush1.xpose.msra.mxu0 0.0
          %517 = vmatprep.subr.mxu0 0.0
          %518 = vmatpush1.xpose.msra.mxu0 0.0
          %519 = vmatprep.mubr.f32.mxu0 0.0
          %520 = vmatmul.mubr.f32.gmra.mrb[0].mxu0 %v441
          %v521 = vpop.f32.mrb[0].mxu0
          %v522 = vadd.f32 %v437, %v521
          %v523 = vpop.f32.mrb[0].mxu0
          %524 = vmatprep.mubr.f32.mxu0 0.0
          %525 = vmatmul.mubr.f32.gmra.mrb[0].mxu0 %v444
          %v526 = vpop.f32.mrb[0].mxu0
          %v527 = vadd.f32 %v437, %v526
          %v528 = vpop.f32.mrb[0].mxu0
          %529 = vmatprep.mubr.f32.mxu0 0.0
          %530 = vmatmul.mubr.f32.gmra.mrb[0].mxu0 %v447
          %v531 = vpop.f32.mrb[0].mxu0
          %v532 = vadd.f32 %v437, %v531
          %v533 = vpop.f32.mrb[0].mxu0
          %534 = vmatprep.mubr.f32.mxu0 0.0
          %535 = vmatmul.mubr.f32.gmra.mrb[0].mxu0 %v450
          %v536 = vpop.f32.mrb[0].mxu0
          %v537 = vadd.f32 %v437, %v536
          %v538 = vpop.f32.mrb[0].mxu0
          %539 = vdwg.mxu0
          %vm540 = vcmask 15360
          %541 = vst.msk [vmem:[#allocation5] sm:$0xff] %vm540, %v522
          %542 = vst.msk [vmem:[#allocation5 + $0x8] sm:$0xff] %vm540, %v527
          %543 = vst.msk [vmem:[#allocation5 + $0x10] sm:$0xff] %vm540, %v532
          %544 = vst.msk [vmem:[#allocation5 + $0x18] sm:$0xff] %vm540, %v537
          %v545 = vsel %vm540, %v522, -inf
          %546 = vmax.xlane.f32.xlu0 %v545
          %v547 = vpop.xlane.xlu0 %546
          %v548 = vsel %vm540, %v527, -inf
          %549 = vmax.xlane.f32.xlu0 %v548
          %v550 = vpop.xlane.xlu0 %549
          %v551 = vsel %vm540, %v532, -inf
          %552 = vmax.xlane.f32.xlu0 %v551
          %v553 = vpop.xlane.xlu0 %552
          %v554 = vsel %vm540, %v537, -inf
          %555 = vmax.xlane.f32.xlu0 %v554
          %v556 = vpop.xlane.xlu0 %555
          %557 = vst.msk [vmem:[#allocation2] sm:$0xff] %vm402, %v547
          %558 = vst.msk [vmem:[#allocation2 + $0x8] sm:$0xff] %vm402, %v550
          %559 = vst.msk [vmem:[#allocation2 + $0x10] sm:$0xff] %vm402, %v553
          %560 = vst.msk [vmem:[#allocation2 + $0x18] sm:$0xff] %vm402, %v556
          %v561 = vsub.f32 %v522, %v547
          %v562 = vsub.f32 %v527, %v550
          %v563 = vsub.f32 %v532, %v553
          %v564 = vsub.f32 %v537, %v556
          %v565 = vmul.f32 %v561, 1.442695
          %v566 = vpow.pop %v565
          %v567 = vmul.f32 %v562, 1.442695
          %v568 = vpow.pop %v567
          %v569 = vmul.f32 %v563, 1.442695
          %v570 = vpow.pop %v569
          %v571 = vmul.f32 %v564, 1.442695
          %v572 = vpow.pop %v571
          %v573 = vsel %vm540, %v566, 0.0
          %574 = vadd.xlane.f32.xlu0 %v573
          %v575 = vpop.xlane.xlu0 %574
          %v576 = vsel %vm540, %v568, 0.0
          %577 = vadd.xlane.f32.xlu0 %v576
          %v578 = vpop.xlane.xlu0 %577
          %v579 = vsel %vm540, %v570, 0.0
          %580 = vadd.xlane.f32.xlu0 %v579
          %v581 = vpop.xlane.xlu0 %580
          %v582 = vsel %vm540, %v572, 0.0
          %583 = vadd.xlane.f32.xlu0 %v582
          %v584 = vpop.xlane.xlu0 %583
          %585 = vst.msk [vmem:[#allocation3] sm:$0xff] %vm402, %v575
          %586 = vst.msk [vmem:[#allocation3 + $0x8] sm:$0xff] %vm402, %v578
          %587 = vst.msk [vmem:[#allocation3 + $0x10] sm:$0xff] %vm402, %v581
          %588 = vst.msk [vmem:[#allocation3 + $0x18] sm:$0xff] %vm402, %v584
        $region48: #{tpu_custom_call.1} parent=43 // pred_fallthru
          _
        %v589 = vld [vmem:[%s362] sm:$0xff]
        %v590 = vld [vmem:[%s362 + $0x8] sm:$0xff]
        %v591 = vld [vmem:[%s362 + $0x10] sm:$0xff]
        %v592 = vld [vmem:[%s362 + $0x18] sm:$0xff]
        %v593 = vld [vmem:[%s362 + $0x20] sm:$0xff]
        %v594 = vld [vmem:[%s362 + $0x28] sm:$0xff]
        %v595 = vld [vmem:[%s362 + $0x30] sm:$0xff]
        %v596 = vld [vmem:[%s362 + $0x38] sm:$0xff]
        %v597 = vld [vmem:[%s362 + $0x40] sm:$0xff]
        %v598 = vld [vmem:[%s362 + $0x48] sm:$0xff]
        %v599 = vld [vmem:[%s362 + $0x50] sm:$0xff]
        %v600 = vld [vmem:[%s362 + $0x58] sm:$0xff]
        %v601 = vld [vmem:[%s362 + $0x60] sm:$0xff]
        %v602 = vld [vmem:[%s362 + $0x68] sm:$0xff]
        %v603 = vld [vmem:[%s362 + $0x70] sm:$0xff]
        %v604 = vld [vmem:[%s362 + $0x78] sm:$0xff]
        %v605 = vld [vmem:[%s370] sm:$0x1]
        %v607 = vlaneseq
        %v608 = vshrl.u32 %v607, 7
        %v609 = vsub.s32 0, %v608
        %v610 = vrot.slane %v605, %v609
        %vm612 = vcmask 523264
        %v614 = vsel %vm612, %v390, 0
        %v617 = vsel %vm612, %v391, 0
        %v620 = vsel %vm612, %v392, 0
        %v623 = vsel %vm612, %v393, 0
        %v626 = vsel %vm612, %v589, 0
        %v629 = vsel %vm612, %v590, 0
        %v632 = vsel %vm612, %v591, 0
        %v635 = vsel %vm612, %v592, 0
        %v638 = vsel %vm612, %v593, 0
        %v641 = vsel %vm612, %v594, 0
        %v644 = vsel %vm612, %v595, 0
        %v647 = vsel %vm612, %v596, 0
        %v650 = vsel %vm612, %v597, 0
        %v653 = vsel %vm612, %v598, 0
        %v656 = vsel %vm612, %v599, 0
        %v659 = vsel %vm612, %v600, 0
        %v662 = vsel %vm612, %v601, 0
        %v665 = vsel %vm612, %v602, 0
        %v668 = vsel %vm612, %v603, 0
        %v671 = vsel %vm612, %v604, 0
        %673 = vmatprep.subr.mxu0 0.0
        %674 = vmatpush1.xpose.msra.mxu0 %v626
        %675 = vmatprep.subr.mxu0 0.0
        %676 = vmatpush1.xpose.msra.mxu0 %v629
        %677 = vmatprep.subr.mxu0 0.0
        %678 = vmatpush1.xpose.msra.mxu0 %v632
        %679 = vmatprep.subr.mxu0 0.0
        %680 = vmatpush1.xpose.msra.mxu0 %v635
        %681 = vmatprep.subr.mxu0 0.0
        %682 = vmatpush1.xpose.msra.mxu0 %v638
        %683 = vmatprep.subr.mxu0 0.0
        %684 = vmatpush1.xpose.msra.mxu0 %v641
        %685 = vmatprep.subr.mxu0 0.0
        %686 = vmatpush1.xpose.msra.mxu0 %v644
        %687 = vmatprep.subr.mxu0 0.0
        %688 = vmatpush1.xpose.msra.mxu0 %v647
        %689 = vmatprep.subr.mxu0 0.0
        %690 = vmatpush1.xpose.msra.mxu0 %v650
        %691 = vmatprep.subr.mxu0 0.0
        %692 = vmatpush1.xpose.msra.mxu0 %v653
        %693 = vmatprep.subr.mxu0 0.0
        %694 = vmatpush1.xpose.msra.mxu0 %v656
        %695 = vmatprep.subr.mxu0 0.0
        %696 = vmatpush1.xpose.msra.mxu0 %v659
        %697 = vmatprep.subr.mxu0 0.0
        %698 = vmatpush1.xpose.msra.mxu0 %v662
        %699 = vmatprep.subr.mxu0 0.0
        %700 = vmatpush1.xpose.msra.mxu0 %v665
        %701 = vmatprep.subr.mxu0 0.0
        %702 = vmatpush1.xpose.msra.mxu0 %v668
        %703 = vmatprep.subr.mxu0 0.0
        %704 = vmatpush1.xpose.msra.mxu0 %v671
        %705 = vmatprep.subr.mxu0 0.0
        %706 = vmatpush1.xpose.msra.mxu0 0.0
        %707 = vmatprep.subr.mxu0 0.0
        %708 = vmatpush1.xpose.msra.mxu0 0.0
        %709 = vmatprep.subr.mxu0 0.0
        %710 = vmatpush1.xpose.msra.mxu0 0.0
        %711 = vmatprep.subr.mxu0 0.0
        %712 = vmatpush1.xpose.msra.mxu0 0.0
        %713 = vmatprep.subr.mxu0 0.0
        %714 = vmatpush1.xpose.msra.mxu0 0.0
        %715 = vmatprep.subr.mxu0 0.0
        %716 = vmatpush1.xpose.msra.mxu0 0.0
        %717 = vmatprep.subr.mxu0 0.0
        %718 = vmatpush1.xpose.msra.mxu0 0.0
        %719 = vmatprep.subr.mxu0 0.0
        %720 = vmatpush1.xpose.msra.mxu0 0.0
        %721 = vmatprep.subr.mxu0 0.0
        %722 = vmatpush1.xpose.msra.mxu0 0.0
        %723 = vmatprep.subr.mxu0 0.0
        %724 = vmatpush1.xpose.msra.mxu0 0.0
        %725 = vmatprep.subr.mxu0 0.0
        %726 = vmatpush1.xpose.msra.mxu0 0.0
        %727 = vmatprep.subr.mxu0 0.0
        %728 = vmatpush1.xpose.msra.mxu0 0.0
        %729 = vmatprep.subr.mxu0 0.0
        %730 = vmatpush1.xpose.msra.mxu0 0.0
        %731 = vmatprep.subr.mxu0 0.0
        %732 = vmatpush1.xpose.msra.mxu0 0.0
        %733 = vmatprep.subr.mxu0 0.0
        %734 = vmatpush1.xpose.msra.mxu0 0.0
        %735 = vmatprep.subr.mxu0 0.0
        %736 = vmatpush1.xpose.msra.mxu0 0.0
        %737 = vmatprep.mubr.f32.mxu0 0.0
        %738 = vmatmul.mubr.f32.gmra.mrb[0].mxu0 %v614
        %v739 = vpop.f32.mrb[0].mxu0
        %v740 = vadd.f32 %v610, %v739
        %v741 = vpop.f32.mrb[0].mxu0
        %742 = vmatprep.mubr.f32.mxu0 0.0
        %743 = vmatmul.mubr.f32.gmra.mrb[0].mxu0 %v617
        %v744 = vpop.f32.mrb[0].mxu0
        %v745 = vadd.f32 %v610, %v744
        %v746 = vpop.f32.mrb[0].mxu0
        %747 = vmatprep.mubr.f32.mxu0 0.0
        %748 = vmatmul.mubr.f32.gmra.mrb[0].mxu0 %v620
        %v749 = vpop.f32.mrb[0].mxu0
        %v750 = vadd.f32 %v610, %v749
        %v751 = vpop.f32.mrb[0].mxu0
        %752 = vmatprep.mubr.f32.mxu0 0.0
        %753 = vmatmul.mubr.f32.gmra.mrb[0].mxu0 %v623
        %v754 = vpop.f32.mrb[0].mxu0
        %v755 = vadd.f32 %v610, %v754
        %v756 = vpop.f32.mrb[0].mxu0
        %757 = vdwg.mxu0
        %s758 = smul.u32 %s29, 128
        %v759 = vlaneseq
        %v760 = vand.u32 %v759, 127
        %v761 = vstv %s758
        %v762 = vadd.s32 %v761, %v760
        %763 = vset.pattern.permute.xlu0 0
        %764 = vperm.xlu0 %763, %v394
        %v765 = vpop.permute.xlu0 %764
        %766 = vset.pattern.permute.xlu0 0
        %767 = vperm.xlu0 %766, %v395
        %v768 = vpop.permute.xlu0 %767
        %769 = vset.pattern.permute.xlu0 0
        %770 = vperm.xlu0 %769, %v396
        %v771 = vpop.permute.xlu0 %770
        %772 = vset.pattern.permute.xlu0 0
        %773 = vperm.xlu0 %772, %v397
        %v774 = vpop.permute.xlu0 %773
        %vm775 = vcmp.eq.s32.totalorder %v762, %v765
        %vm776 = vcmp.eq.s32.totalorder %v762, %v768
        %vm777 = vcmp.eq.s32.totalorder %v762, %v771
        %vm778 = vcmp.eq.s32.totalorder %v762, %v774
        %v779 = vld [vmem:[#allocation4] sm:$0xff]
        %v780 = vld [vmem:[#allocation4 + $0x8] sm:$0xff]
        %v781 = vld [vmem:[#allocation4 + $0x10] sm:$0xff]
        %v782 = vld [vmem:[#allocation4 + $0x18] sm:$0xff]
        %v783 = vsel %vm775, %v740, 0.0
        %v784 = vsel %vm776, %v745, 0.0
        %v785 = vsel %vm777, %v750, 0.0
        %v786 = vsel %vm778, %v755, 0.0
        %787 = vadd.xlane.f32.xlu0 %v783
        %v788 = vpop.xlane.xlu0 %787
        %789 = vadd.xlane.f32.xlu0 %v784
        %v790 = vpop.xlane.xlu0 %789
        %791 = vadd.xlane.f32.xlu0 %v785
        %v792 = vpop.xlane.xlu0 %791
        %793 = vadd.xlane.f32.xlu0 %v786
        %v794 = vpop.xlane.xlu0 %793
        %v795 = vadd.f32 %v779, %v788
        %v796 = vadd.f32 %v780, %v790
        %v797 = vadd.f32 %v781, %v792
        %v798 = vadd.f32 %v782, %v794
        %vm799 = vcmask 7168
        %800 = vst.msk [vmem:[#allocation4] sm:$0xff] %vm799, %v795
        %801 = vst.msk [vmem:[#allocation4 + $0x8] sm:$0xff] %vm799, %v796
        %802 = vst.msk [vmem:[#allocation4 + $0x10] sm:$0xff] %vm799, %v797
        %803 = vst.msk [vmem:[#allocation4 + $0x18] sm:$0xff] %vm799, %v798
        %s804 = sld [smem:[#allocation7 + %s29]]
        %p805 = scmp.ge.s32.totalorder %s804, 0
        // Predicated region
        $region49: #{tpu_custom_call.1} parent=43 // pred_check
          %p806 = pneg %p805
        $region50: #{tpu_custom_call.1} parent=43 // pred_check_branch
          %808 = sbr.rel (%p806) target = $region52
        $region51: #{tpu_custom_call.1} parent=43 // pred_region
          %s809 = smul.u32 %s804, 32
          %s810 = scalar_lea.vmem [#allocation2], %s809
          %v811 = vld [vmem:[%s810] sm:$0xff]
          %v812 = vld [vmem:[%s810 + $0x8] sm:$0xff]
          %v813 = vld [vmem:[%s810 + $0x10] sm:$0xff]
          %v814 = vld [vmem:[%s810 + $0x18] sm:$0xff]
          %815 = vmax.xlane.f32.xlu0 %v740
          %v816 = vpop.xlane.xlu0 %815
          %817 = vmax.xlane.f32.xlu0 %v745
          %v818 = vpop.xlane.xlu0 %817
          %819 = vmax.xlane.f32.xlu0 %v750
          %v820 = vpop.xlane.xlu0 %819
          %821 = vmax.xlane.f32.xlu0 %v755
          %v822 = vpop.xlane.xlu0 %821
          %v823 = vmax.f32 %v811, %v816
          %v824 = vmax.f32 %v812, %v818
          %v825 = vmax.f32 %v813, %v820
          %v826 = vmax.f32 %v814, %v822
          %828 = vset.pattern.permute.xlu0 0
          %829 = vperm.xlu0 %828, %v823
          %v830 = vpop.permute.xlu0 %829
          %833 = vset.pattern.permute.xlu0 0
          %834 = vperm.xlu0 %833, %v824
          %v835 = vpop.permute.xlu0 %834
          %838 = vset.pattern.permute.xlu0 0
          %839 = vperm.xlu0 %838, %v825
          %v840 = vpop.permute.xlu0 %839
          %843 = vset.pattern.permute.xlu0 0
          %844 = vperm.xlu0 %843, %v826
          %v845 = vpop.permute.xlu0 %844
          %v847 = vsub.f32 %v740, %v830
          %v848 = vsub.f32 %v745, %v835
          %v849 = vsub.f32 %v750, %v840
          %v850 = vsub.f32 %v755, %v845
          %v851 = vmul.f32 %v847, 1.442695
          %v852 = vpow.pop %v851
          %v853 = vmul.f32 %v848, 1.442695
          %v854 = vpow.pop %v853
          %v855 = vmul.f32 %v849, 1.442695
          %v856 = vpow.pop %v855
          %v857 = vmul.f32 %v850, 1.442695
          %v858 = vpow.pop %v857
          %859 = vadd.xlane.f32.xlu0 %v852
          %v860 = vpop.xlane.xlu0 %859
          %861 = vadd.xlane.f32.xlu0 %v854
          %v862 = vpop.xlane.xlu0 %861
          %863 = vadd.xlane.f32.xlu0 %v856
          %v864 = vpop.xlane.xlu0 %863
          %865 = vadd.xlane.f32.xlu0 %v858
          %v866 = vpop.xlane.xlu0 %865
          %v867 = vsub.f32 %v811, %v823
          %v868 = vsub.f32 %v812, %v824
          %v869 = vsub.f32 %v813, %v825
          %v870 = vsub.f32 %v814, %v826
          %v871 = vmul.f32 %v867, 1.442695
          %v872 = vpow.pop %v871
          %v873 = vmul.f32 %v868, 1.442695
          %v874 = vpow.pop %v873
          %v875 = vmul.f32 %v869, 1.442695
          %v876 = vpow.pop %v875
          %v877 = vmul.f32 %v870, 1.442695
          %v878 = vpow.pop %v877
          %s879 = scalar_lea.vmem [#allocation3], %s809
          %v880 = vld [vmem:[%s879] sm:$0xff]
          %v881 = vld [vmem:[%s879 + $0x8] sm:$0xff]
          %v882 = vld [vmem:[%s879 + $0x10] sm:$0xff]
          %v883 = vld [vmem:[%s879 + $0x18] sm:$0xff]
          %v884 = vmul.f32 %v872, %v880
          %v885 = vmul.f32 %v874, %v881
          %v886 = vmul.f32 %v876, %v882
          %v887 = vmul.f32 %v878, %v883
          %v888 = vadd.f32 %v884, %v860
          %v889 = vadd.f32 %v885, %v862
          %v890 = vadd.f32 %v886, %v864
          %v891 = vadd.f32 %v887, %v866
          %892 = vst.msk [vmem:[%s879] sm:$0xff] %vm799, %v888
          %893 = vst.msk [vmem:[%s879 + $0x8] sm:$0xff] %vm799, %v889
          %894 = vst.msk [vmem:[%s879 + $0x10] sm:$0xff] %vm799, %v890
          %895 = vst.msk [vmem:[%s879 + $0x18] sm:$0xff] %vm799, %v891
          %896 = vst.msk [vmem:[%s810] sm:$0xff] %vm799, %v823
          %897 = vst.msk [vmem:[%s810 + $0x8] sm:$0xff] %vm799, %v824
          %898 = vst.msk [vmem:[%s810 + $0x10] sm:$0xff] %vm799, %v825
          %899 = vst.msk [vmem:[%s810 + $0x18] sm:$0xff] %vm799, %v826
        $region52: #{tpu_custom_call.1} parent=43 // pred_fallthru
          _
        %p900 = scmp.lt.s32.totalorder %s804, 0
        // Predicated region
        $region53: #{tpu_custom_call.1} parent=43 // pred_check
          %p901 = pneg %p900
        $region54: #{tpu_custom_call.1} parent=43 // pred_check_branch
          %903 = sbr.rel (%p901) target = $region56
        $region55: #{tpu_custom_call.1} parent=43 // pred_region
          %vm904 = vcmp.ge.s32.totalorder %v762, 0
          %vm905 = vcmp.lt.s32.totalorder %v762, 100
          %vm906 = vmand %vm904, %vm905
          %v907 = vsel %vm906, 1, 0
          %vm908 = vcmp.eq.s32.totalorder %v907, 1
          %v909 = vsel %vm908, %v740, -inf
          %v910 = vsel %vm908, %v745, -inf
          %v911 = vsel %vm908, %v750, -inf
          %v912 = vsel %vm908, %v755, -inf
          %913 = vmax.xlane.f32.xlu0 %v909
          %v914 = vpop.xlane.xlu0 %913
          %915 = vmax.xlane.f32.xlu0 %v910
          %v916 = vpop.xlane.xlu0 %915
          %917 = vmax.xlane.f32.xlu0 %v911
          %v918 = vpop.xlane.xlu0 %917
          %919 = vmax.xlane.f32.xlu0 %v912
          %v920 = vpop.xlane.xlu0 %919
          %v921 = vld [vmem:[#allocation2] sm:$0xff]
          %v922 = vld [vmem:[#allocation2 + $0x8] sm:$0xff]
          %v923 = vld [vmem:[#allocation2 + $0x10] sm:$0xff]
          %v924 = vld [vmem:[#allocation2 + $0x18] sm:$0xff]
          %v925 = vmax.f32 %v921, %v914
          %v926 = vmax.f32 %v922, %v916
          %v927 = vmax.f32 %v923, %v918
          %v928 = vmax.f32 %v924, %v920
          %vm929 = vcmp.ge.s32.totalorder %v762, 100
          %vm930 = vcmp.lt.s32.totalorder %v762, 256
          %vm931 = vmand %vm929, %vm930
          %v932 = vsel %vm931, 1, 0
          %vm933 = vcmp.eq.s32.totalorder %v932, 1
          %v934 = vsel %vm933, %v740, -inf
          %v935 = vsel %vm933, %v745, -inf
          %v936 = vsel %vm933, %v750, -inf
          %v937 = vsel %vm933, %v755, -inf
          %938 = vmax.xlane.f32.xlu0 %v934
          %v939 = vpop.xlane.xlu0 %938
          %940 = vmax.xlane.f32.xlu0 %v935
          %v941 = vpop.xlane.xlu0 %940
          %942 = vmax.xlane.f32.xlu0 %v936
          %v943 = vpop.xlane.xlu0 %942
          %944 = vmax.xlane.f32.xlu0 %v937
          %v945 = vpop.xlane.xlu0 %944
          %s946 = scalar_lea.vmem [#allocation2], 32
          %v947 = vld [vmem:[%s946] sm:$0xff]
          %v948 = vld [vmem:[%s946 + $0x8] sm:$0xff]
          %v949 = vld [vmem:[%s946 + $0x10] sm:$0xff]
          %v950 = vld [vmem:[%s946 + $0x18] sm:$0xff]
          %v951 = vmax.f32 %v947, %v939
          %v952 = vmax.f32 %v948, %v941
          %v953 = vmax.f32 %v949, %v943
          %v954 = vmax.f32 %v950, %v945
          %vm955 = vcmp.ge.s32.totalorder %v762, 256
          %vm956 = vcmp.lt.s32.totalorder %v762, 520
          %vm957 = vmand %vm955, %vm956
          %v958 = vsel %vm957, 1, 0
          %vm959 = vcmp.eq.s32.totalorder %v958, 1
          %v960 = vsel %vm959, %v740, -inf
          %v961 = vsel %vm959, %v745, -inf
          %v962 = vsel %vm959, %v750, -inf
          %v963 = vsel %vm959, %v755, -inf
          %964 = vmax.xlane.f32.xlu0 %v960
          %v965 = vpop.xlane.xlu0 %964
          %966 = vmax.xlane.f32.xlu0 %v961
          %v967 = vpop.xlane.xlu0 %966
          %968 = vmax.xlane.f32.xlu0 %v962
          %v969 = vpop.xlane.xlu0 %968
          %970 = vmax.xlane.f32.xlu0 %v963
          %v971 = vpop.xlane.xlu0 %970
          %s972 = scalar_lea.vmem [#allocation2], 64
          %v973 = vld [vmem:[%s972] sm:$0xff]
          %v974 = vld [vmem:[%s972 + $0x8] sm:$0xff]
          %v975 = vld [vmem:[%s972 + $0x10] sm:$0xff]
          %v976 = vld [vmem:[%s972 + $0x18] sm:$0xff]
          %v977 = vmax.f32 %v973, %v965
          %v978 = vmax.f32 %v974, %v967
          %v979 = vmax.f32 %v975, %v969
          %v980 = vmax.f32 %v976, %v971
          %982 = vset.pattern.permute.xlu0 0
          %983 = vperm.xlu0 %982, %v925
          %v984 = vpop.permute.xlu0 %983
          %987 = vset.pattern.permute.xlu0 0
          %988 = vperm.xlu0 %987, %v926
          %v989 = vpop.permute.xlu0 %988
          %992 = vset.pattern.permute.xlu0 0
          %993 = vperm.xlu0 %992, %v927
          %v994 = vpop.permute.xlu0 %993
          %997 = vset.pattern.permute.xlu0 0
          %998 = vperm.xlu0 %997, %v928
          %v999 = vpop.permute.xlu0 %998
          %v1001 = vsel %vm908, %v984, 0.0
          %v1002 = vsel %vm908, %v989, 0.0
          %v1003 = vsel %vm908, %v994, 0.0
          %v1004 = vsel %vm908, %v999, 0.0
          %1006 = vset.pattern.permute.xlu0 0
          %1007 = vperm.xlu0 %1006, %v951
          %v1008 = vpop.permute.xlu0 %1007
          %1011 = vset.pattern.permute.xlu0 0
          %1012 = vperm.xlu0 %1011, %v952
          %v1013 = vpop.permute.xlu0 %1012
          %1016 = vset.pattern.permute.xlu0 0
          %1017 = vperm.xlu0 %1016, %v953
          %v1018 = vpop.permute.xlu0 %1017
          %1021 = vset.pattern.permute.xlu0 0
          %1022 = vperm.xlu0 %1021, %v954
          %v1023 = vpop.permute.xlu0 %1022
          %v1025 = vsel %vm933, %v1008, %v1001
          %v1026 = vsel %vm933, %v1013, %v1002
          %v1027 = vsel %vm933, %v1018, %v1003
          %v1028 = vsel %vm933, %v1023, %v1004
          %vm1029 = vmor %vm906, %vm931
          %1031 = vset.pattern.permute.xlu0 0
          %1032 = vperm.xlu0 %1031, %v977
          %v1033 = vpop.permute.xlu0 %1032
          %1036 = vset.pattern.permute.xlu0 0
          %1037 = vperm.xlu0 %1036, %v978
          %v1038 = vpop.permute.xlu0 %1037
          %1041 = vset.pattern.permute.xlu0 0
          %1042 = vperm.xlu0 %1041, %v979
          %v1043 = vpop.permute.xlu0 %1042
          %1046 = vset.pattern.permute.xlu0 0
          %1047 = vperm.xlu0 %1046, %v980
          %v1048 = vpop.permute.xlu0 %1047
          %v1050 = vsel %vm959, %v1033, %v1025
          %v1051 = vsel %vm959, %v1038, %v1026
          %v1052 = vsel %vm959, %v1043, %v1027
          %v1053 = vsel %vm959, %v1048, %v1028
          %vm1054 = vmor %vm1029, %vm957
          %v1055 = vsub.f32 %v740, %v1050
          %v1056 = vsub.f32 %v745, %v1051
          %v1057 = vsub.f32 %v750, %v1052
          %v1058 = vsub.f32 %v755, %v1053
          %v1059 = vmul.f32 %v1055, 1.442695
          %v1060 = vpow.pop %v1059
          %v1061 = vmul.f32 %v1056, 1.442695
          %v1062 = vpow.pop %v1061
          %v1063 = vmul.f32 %v1057, 1.442695
          %v1064 = vpow.pop %v1063
          %v1065 = vmul.f32 %v1058, 1.442695
          %v1066 = vpow.pop %v1065
          %v1067 = vsel %vm1054, 1, 0
          %vm1068 = vcmp.eq.s32.totalorder %v1067, 1
          %v1069 = vsel %vm1068, %v1060, 0.0
          %v1070 = vsel %vm1068, %v1062, 0.0
          %v1071 = vsel %vm1068, %v1064, 0.0
          %v1072 = vsel %vm1068, %v1066, 0.0
          %v1073 = vsel %vm908, %v1069, 0.0
          %v1074 = vsel %vm908, %v1070, 0.0
          %v1075 = vsel %vm908, %v1071, 0.0
          %v1076 = vsel %vm908, %v1072, 0.0
          %1077 = vadd.xlane.f32.xlu0 %v1073
          %v1078 = vpop.xlane.xlu0 %1077
          %1079 = vadd.xlane.f32.xlu0 %v1074
          %v1080 = vpop.xlane.xlu0 %1079
          %1081 = vadd.xlane.f32.xlu0 %v1075
          %v1082 = vpop.xlane.xlu0 %1081
          %1083 = vadd.xlane.f32.xlu0 %v1076
          %v1084 = vpop.xlane.xlu0 %1083
          %vm1085 = vcmp.eq.f32.partialorder %v925, -inf
          %vm1086 = vcmp.eq.f32.partialorder %v926, -inf
          %vm1087 = vcmp.eq.f32.partialorder %v927, -inf
          %vm1088 = vcmp.eq.f32.partialorder %v928, -inf
          %v1089 = vsub.f32 %v921, %v925
          %v1090 = vsub.f32 %v922, %v926
          %v1091 = vsub.f32 %v923, %v927
          %v1092 = vsub.f32 %v924, %v928
          %v1093 = vmul.f32 %v1089, 1.442695
          %v1094 = vpow.pop %v1093
          %v1095 = vmul.f32 %v1090, 1.442695
          %v1096 = vpow.pop %v1095
          %v1097 = vmul.f32 %v1091, 1.442695
          %v1098 = vpow.pop %v1097
          %v1099 = vmul.f32 %v1092, 1.442695
          %v1100 = vpow.pop %v1099
          %v1101 = vsel %vm1085, 0.0, %v1094
          %v1102 = vsel %vm1086, 0.0, %v1096
          %v1103 = vsel %vm1087, 0.0, %v1098
          %v1104 = vsel %vm1088, 0.0, %v1100
          %v1105 = vld [vmem:[#allocation3] sm:$0xff]
          %v1106 = vld [vmem:[#allocation3 + $0x8] sm:$0xff]
          %v1107 = vld [vmem:[#allocation3 + $0x10] sm:$0xff]
          %v1108 = vld [vmem:[#allocation3 + $0x18] sm:$0xff]
          %v1109 = vmul.f32 %v1101, %v1105
          %v1110 = vmul.f32 %v1102, %v1106
          %v1111 = vmul.f32 %v1103, %v1107
          %v1112 = vmul.f32 %v1104, %v1108
          %v1113 = vadd.f32 %v1109, %v1078
          %v1114 = vadd.f32 %v1110, %v1080
          %v1115 = vadd.f32 %v1111, %v1082
          %v1116 = vadd.f32 %v1112, %v1084
          %1117 = vst.msk [vmem:[#allocation3] sm:$0xff] %vm799, %v1113
          %1118 = vst.msk [vmem:[#allocation3 + $0x8] sm:$0xff] %vm799, %v1114
          %1119 = vst.msk [vmem:[#allocation3 + $0x10] sm:$0xff] %vm799, %v1115
          %1120 = vst.msk [vmem:[#allocation3 + $0x18] sm:$0xff] %vm799, %v1116
          %1121 = vst.msk [vmem:[#allocation2] sm:$0xff] %vm799, %v925
          %1122 = vst.msk [vmem:[#allocation2 + $0x8] sm:$0xff] %vm799, %v926
          %1123 = vst.msk [vmem:[#allocation2 + $0x10] sm:$0xff] %vm799, %v927
          %1124 = vst.msk [vmem:[#allocation2 + $0x18] sm:$0xff] %vm799, %v928
          %v1125 = vsel %vm933, %v1069, 0.0
          %v1126 = vsel %vm933, %v1070, 0.0
          %v1127 = vsel %vm933, %v1071, 0.0
          %v1128 = vsel %vm933, %v1072, 0.0
          %1129 = vadd.xlane.f32.xlu0 %v1125
          %v1130 = vpop.xlane.xlu0 %1129
          %1131 = vadd.xlane.f32.xlu0 %v1126
          %v1132 = vpop.xlane.xlu0 %1131
          %1133 = vadd.xlane.f32.xlu0 %v1127
          %v1134 = vpop.xlane.xlu0 %1133
          %1135 = vadd.xlane.f32.xlu0 %v1128
          %v1136 = vpop.xlane.xlu0 %1135
          %vm1137 = vcmp.eq.f32.partialorder %v951, -inf
          %vm1138 = vcmp.eq.f32.partialorder %v952, -inf
          %vm1139 = vcmp.eq.f32.partialorder %v953, -inf
          %vm1140 = vcmp.eq.f32.partialorder %v954, -inf
          %v1141 = vsub.f32 %v947, %v951
          %v1142 = vsub.f32 %v948, %v952
          %v1143 = vsub.f32 %v949, %v953
          %v1144 = vsub.f32 %v950, %v954
          %v1145 = vmul.f32 %v1141, 1.442695
          %v1146 = vpow.pop %v1145
          %v1147 = vmul.f32 %v1142, 1.442695
          %v1148 = vpow.pop %v1147
          %v1149 = vmul.f32 %v1143, 1.442695
          %v1150 = vpow.pop %v1149
          %v1151 = vmul.f32 %v1144, 1.442695
          %v1152 = vpow.pop %v1151
          %v1153 = vsel %vm1137, 0.0, %v1146
          %v1154 = vsel %vm1138, 0.0, %v1148
          %v1155 = vsel %vm1139, 0.0, %v1150
          %v1156 = vsel %vm1140, 0.0, %v1152
          %s1157 = scalar_lea.vmem [#allocation3], 32
          %v1158 = vld [vmem:[%s1157] sm:$0xff]
          %v1159 = vld [vmem:[%s1157 + $0x8] sm:$0xff]
          %v1160 = vld [vmem:[%s1157 + $0x10] sm:$0xff]
          %v1161 = vld [vmem:[%s1157 + $0x18] sm:$0xff]
          %v1162 = vmul.f32 %v1153, %v1158
          %v1163 = vmul.f32 %v1154, %v1159
          %v1164 = vmul.f32 %v1155, %v1160
          %v1165 = vmul.f32 %v1156, %v1161
          %v1166 = vadd.f32 %v1162, %v1130
          %v1167 = vadd.f32 %v1163, %v1132
          %v1168 = vadd.f32 %v1164, %v1134
          %v1169 = vadd.f32 %v1165, %v1136
          %1170 = vst.msk [vmem:[%s1157] sm:$0xff] %vm799, %v1166
          %1171 = vst.msk [vmem:[%s1157 + $0x8] sm:$0xff] %vm799, %v1167
          %1172 = vst.msk [vmem:[%s1157 + $0x10] sm:$0xff] %vm799, %v1168
          %1173 = vst.msk [vmem:[%s1157 + $0x18] sm:$0xff] %vm799, %v1169
          %1174 = vst.msk [vmem:[%s946] sm:$0xff] %vm799, %v951
          %1175 = vst.msk [vmem:[%s946 + $0x8] sm:$0xff] %vm799, %v952
          %1176 = vst.msk [vmem:[%s946 + $0x10] sm:$0xff] %vm799, %v953
          %1177 = vst.msk [vmem:[%s946 + $0x18] sm:$0xff] %vm799, %v954
          %v1178 = vsel %vm959, %v1069, 0.0
          %v1179 = vsel %vm959, %v1070, 0.0
          %v1180 = vsel %vm959, %v1071, 0.0
          %v1181 = vsel %vm959, %v1072, 0.0
          %1182 = vadd.xlane.f32.xlu0 %v1178
          %v1183 = vpop.xlane.xlu0 %1182
          %1184 = vadd.xlane.f32.xlu0 %v1179
          %v1185 = vpop.xlane.xlu0 %1184
          %1186 = vadd.xlane.f32.xlu0 %v1180
          %v1187 = vpop.xlane.xlu0 %1186
          %1188 = vadd.xlane.f32.xlu0 %v1181
          %v1189 = vpop.xlane.xlu0 %1188
          %vm1190 = vcmp.eq.f32.partialorder %v977, -inf
          %vm1191 = vcmp.eq.f32.partialorder %v978, -inf
          %vm1192 = vcmp.eq.f32.partialorder %v979, -inf
          %vm1193 = vcmp.eq.f32.partialorder %v980, -inf
          %v1194 = vsub.f32 %v973, %v977
          %v1195 = vsub.f32 %v974, %v978
          %v1196 = vsub.f32 %v975, %v979
          %v1197 = vsub.f32 %v976, %v980
          %v1198 = vmul.f32 %v1194, 1.442695
          %v1199 = vpow.pop %v1198
          %v1200 = vmul.f32 %v1195, 1.442695
          %v1201 = vpow.pop %v1200
          %v1202 = vmul.f32 %v1196, 1.442695
          %v1203 = vpow.pop %v1202
          %v1204 = vmul.f32 %v1197, 1.442695
          %v1205 = vpow.pop %v1204
          %v1206 = vsel %vm1190, 0.0, %v1199
          %v1207 = vsel %vm1191, 0.0, %v1201
          %v1208 = vsel %vm1192, 0.0, %v1203
          %v1209 = vsel %vm1193, 0.0, %v1205
          %s1210 = scalar_lea.vmem [#allocation3], 64
          %v1211 = vld [vmem:[%s1210] sm:$0xff]
          %v1212 = vld [vmem:[%s1210 + $0x8] sm:$0xff]
          %v1213 = vld [vmem:[%s1210 + $0x10] sm:$0xff]
          %v1214 = vld [vmem:[%s1210 + $0x18] sm:$0xff]
          %v1215 = vmul.f32 %v1206, %v1211
          %v1216 = vmul.f32 %v1207, %v1212
          %v1217 = vmul.f32 %v1208, %v1213
          %v1218 = vmul.f32 %v1209, %v1214
          %v1219 = vadd.f32 %v1215, %v1183
          %v1220 = vadd.f32 %v1216, %v1185
          %v1221 = vadd.f32 %v1217, %v1187
          %v1222 = vadd.f32 %v1218, %v1189
          %1223 = vst.msk [vmem:[%s1210] sm:$0xff] %vm799, %v1219
          %1224 = vst.msk [vmem:[%s1210 + $0x8] sm:$0xff] %vm799, %v1220
          %1225 = vst.msk [vmem:[%s1210 + $0x10] sm:$0xff] %vm799, %v1221
          %1226 = vst.msk [vmem:[%s1210 + $0x18] sm:$0xff] %vm799, %v1222
          %1227 = vst.msk [vmem:[%s972] sm:$0xff] %vm799, %v977
          %1228 = vst.msk [vmem:[%s972 + $0x8] sm:$0xff] %vm799, %v978
          %1229 = vst.msk [vmem:[%s972 + $0x10] sm:$0xff] %vm799, %v979
          %1230 = vst.msk [vmem:[%s972 + $0x18] sm:$0xff] %vm799, %v980
        $region56: #{tpu_custom_call.1} parent=43 // pred_fallthru
          _
        %p1231 = scmp.eq.s32.totalorder %s29, 4
        // Predicated region
        $region57: #{tpu_custom_call.1} parent=43 // pred_check
          %p1232 = pneg %p1231
        $region58: #{tpu_custom_call.1} parent=43 // pred_check_branch
          %1234 = sbr.rel (%p1232) target = $region60
        $region59: #{tpu_custom_call.1} parent=43 // pred_region
          %vm1235 = vcmp.ge.s32.totalorder %v394, 100
          %vm1236 = vcmp.ge.s32.totalorder %v395, 100
          %vm1237 = vcmp.ge.s32.totalorder %v396, 100
          %vm1238 = vcmp.ge.s32.totalorder %v397, 100
          %v1239 = vsel %vm1235, 1, 0
          %v1240 = vsel %vm1236, 1, 0
          %v1241 = vsel %vm1237, 1, 0
          %v1242 = vsel %vm1238, 1, 0
          %vm1243 = vcmp.ge.s32.totalorder %v394, 256
          %vm1244 = vcmp.ge.s32.totalorder %v395, 256
          %vm1245 = vcmp.ge.s32.totalorder %v396, 256
          %vm1246 = vcmp.ge.s32.totalorder %v397, 256
          %v1247 = vsel %vm1243, 1, 0
          %v1248 = vsel %vm1244, 1, 0
          %v1249 = vsel %vm1245, 1, 0
          %v1250 = vsel %vm1246, 1, 0
          %v1251 = vadd.s32 %v1239, %v1247
          %v1252 = vadd.s32 %v1240, %v1248
          %v1253 = vadd.s32 %v1241, %v1249
          %v1254 = vadd.s32 %v1242, %v1250
          %vm1255 = vcmp.eq.s32.totalorder %v1251, 0
          %vm1256 = vcmp.eq.s32.totalorder %v1252, 0
          %vm1257 = vcmp.eq.s32.totalorder %v1253, 0
          %vm1258 = vcmp.eq.s32.totalorder %v1254, 0
          %v1259 = vld [vmem:[#allocation2] sm:$0xff]
          %v1260 = vld [vmem:[#allocation2 + $0x8] sm:$0xff]
          %v1261 = vld [vmem:[#allocation2 + $0x10] sm:$0xff]
          %v1262 = vld [vmem:[#allocation2 + $0x18] sm:$0xff]
          %v1263 = vsel %vm1255, %v1259, 0.0
          %v1264 = vsel %vm1256, %v1260, 0.0
          %v1265 = vsel %vm1257, %v1261, 0.0
          %v1266 = vsel %vm1258, %v1262, 0.0
          %v1267 = vld [vmem:[#allocation3] sm:$0xff]
          %v1268 = vld [vmem:[#allocation3 + $0x8] sm:$0xff]
          %v1269 = vld [vmem:[#allocation3 + $0x10] sm:$0xff]
          %v1270 = vld [vmem:[#allocation3 + $0x18] sm:$0xff]
          %v1271 = vsel %vm1255, %v1267, 1.0
          %v1272 = vsel %vm1256, %v1268, 1.0
          %v1273 = vsel %vm1257, %v1269, 1.0
          %v1274 = vsel %vm1258, %v1270, 1.0
          %vm1275 = vcmp.eq.s32.totalorder %v1251, 1
          %vm1276 = vcmp.eq.s32.totalorder %v1252, 1
          %vm1277 = vcmp.eq.s32.totalorder %v1253, 1
          %vm1278 = vcmp.eq.s32.totalorder %v1254, 1
          %s1279 = scalar_lea.vmem [#allocation2], 32
          %v1280 = vld [vmem:[%s1279] sm:$0xff]
          %v1281 = vld [vmem:[%s1279 + $0x8] sm:$0xff]
          %v1282 = vld [vmem:[%s1279 + $0x10] sm:$0xff]
          %v1283 = vld [vmem:[%s1279 + $0x18] sm:$0xff]
          %v1284 = vsel %vm1275, %v1280, %v1263
          %v1285 = vsel %vm1276, %v1281, %v1264
          %v1286 = vsel %vm1277, %v1282, %v1265
          %v1287 = vsel %vm1278, %v1283, %v1266
          %s1288 = scalar_lea.vmem [#allocation3], 32
          %v1289 = vld [vmem:[%s1288] sm:$0xff]
          %v1290 = vld [vmem:[%s1288 + $0x8] sm:$0xff]
          %v1291 = vld [vmem:[%s1288 + $0x10] sm:$0xff]
          %v1292 = vld [vmem:[%s1288 + $0x18] sm:$0xff]
          %v1293 = vsel %vm1275, %v1289, %v1271
          %v1294 = vsel %vm1276, %v1290, %v1272
          %v1295 = vsel %vm1277, %v1291, %v1273
          %v1296 = vsel %vm1278, %v1292, %v1274
          %vm1297 = vcmp.eq.s32.totalorder %v1251, 2
          %vm1298 = vcmp.eq.s32.totalorder %v1252, 2
          %vm1299 = vcmp.eq.s32.totalorder %v1253, 2
          %vm1300 = vcmp.eq.s32.totalorder %v1254, 2
          %s1301 = scalar_lea.vmem [#allocation2], 64
          %v1302 = vld [vmem:[%s1301] sm:$0xff]
          %v1303 = vld [vmem:[%s1301 + $0x8] sm:$0xff]
          %v1304 = vld [vmem:[%s1301 + $0x10] sm:$0xff]
          %v1305 = vld [vmem:[%s1301 + $0x18] sm:$0xff]
          %v1306 = vsel %vm1297, %v1302, %v1284
          %v1307 = vsel %vm1298, %v1303, %v1285
          %v1308 = vsel %vm1299, %v1304, %v1286
          %v1309 = vsel %vm1300, %v1305, %v1287
          %s1310 = scalar_lea.vmem [#allocation3], 64
          %v1311 = vld [vmem:[%s1310] sm:$0xff]
          %v1312 = vld [vmem:[%s1310 + $0x8] sm:$0xff]
          %v1313 = vld [vmem:[%s1310 + $0x10] sm:$0xff]
          %v1314 = vld [vmem:[%s1310 + $0x18] sm:$0xff]
          %v1315 = vsel %vm1297, %v1311, %v1293
          %v1316 = vsel %vm1298, %v1312, %v1294
          %v1317 = vsel %vm1299, %v1313, %v1295
          %v1318 = vsel %vm1300, %v1314, %v1296
          %v1319 = vld [vmem:[#allocation4] sm:$0xff]
          %v1320 = vld [vmem:[#allocation4 + $0x8] sm:$0xff]
          %v1321 = vld [vmem:[#allocation4 + $0x10] sm:$0xff]
          %v1322 = vld [vmem:[#allocation4 + $0x18] sm:$0xff]
          %v1323 = vsub.f32 %v1319, %v1306
          %v1324 = vsub.f32 %v1320, %v1307
          %v1325 = vsub.f32 %v1321, %v1308
          %v1326 = vsub.f32 %v1322, %v1309
          %v1327 = vlog2.pop %v1315
          %v1328 = vmul.f32 %v1327, 0.6931472
          %v1329 = vlog2.pop %v1316
          %v1330 = vmul.f32 %v1329, 0.6931472
          %v1331 = vlog2.pop %v1317
          %v1332 = vmul.f32 %v1331, 0.6931472
          %v1333 = vlog2.pop %v1318
          %v1334 = vmul.f32 %v1333, 0.6931472
          %v1335 = vsub.f32 %v1323, %v1328
          %v1336 = vsub.f32 %v1324, %v1330
          %v1337 = vsub.f32 %v1325, %v1332
          %v1338 = vsub.f32 %v1326, %v1334
          %v1339 = vld [vmem:[#allocation5] sm:$0xff]
          %v1340 = vld [vmem:[#allocation5 + $0x8] sm:$0xff]
          %v1341 = vld [vmem:[#allocation5 + $0x10] sm:$0xff]
          %v1342 = vld [vmem:[#allocation5 + $0x18] sm:$0xff]
          %1344 = vset.pattern.permute.xlu0 0
          %1345 = vperm.xlu0 %1344, %v1259
          %v1346 = vpop.permute.xlu0 %1345
          %1349 = vset.pattern.permute.xlu0 0
          %1350 = vperm.xlu0 %1349, %v1260
          %v1351 = vpop.permute.xlu0 %1350
          %1354 = vset.pattern.permute.xlu0 0
          %1355 = vperm.xlu0 %1354, %v1261
          %v1356 = vpop.permute.xlu0 %1355
          %1359 = vset.pattern.permute.xlu0 0
          %1360 = vperm.xlu0 %1359, %v1262
          %v1361 = vpop.permute.xlu0 %1360
          %v1363 = vsub.f32 %v1339, %v1346
          %v1364 = vsub.f32 %v1340, %v1351
          %v1365 = vsub.f32 %v1341, %v1356
          %v1366 = vsub.f32 %v1342, %v1361
          %v1367 = vlog2.pop %v1267
          %v1368 = vmul.f32 %v1367, 0.6931472
          %v1369 = vlog2.pop %v1268
          %v1370 = vmul.f32 %v1369, 0.6931472
          %v1371 = vlog2.pop %v1269
          %v1372 = vmul.f32 %v1371, 0.6931472
          %v1373 = vlog2.pop %v1270
          %v1374 = vmul.f32 %v1373, 0.6931472
          %1376 = vset.pattern.permute.xlu0 0
          %1377 = vperm.xlu0 %1376, %v1368
          %v1378 = vpop.permute.xlu0 %1377
          %1381 = vset.pattern.permute.xlu0 0
          %1382 = vperm.xlu0 %1381, %v1370
          %v1383 = vpop.permute.xlu0 %1382
          %1386 = vset.pattern.permute.xlu0 0
          %1387 = vperm.xlu0 %1386, %v1372
          %v1388 = vpop.permute.xlu0 %1387
          %1391 = vset.pattern.permute.xlu0 0
          %1392 = vperm.xlu0 %1391, %v1374
          %v1393 = vpop.permute.xlu0 %1392
          %v1395 = vsub.f32 %v1363, %v1378
          %v1396 = vsub.f32 %v1364, %v1383
          %v1397 = vsub.f32 %v1365, %v1388
          %v1398 = vsub.f32 %v1366, %v1393
          %1403 = vrot.lane.b32.xlu0 %v1395, 127
          %v1404 = vpop.permute.xlu0 %1403
          %1405 = vrot.lane.b32.xlu0 %v1396, 127
          %v1406 = vpop.permute.xlu0 %1405
          %1407 = vrot.lane.b32.xlu0 %v1397, 127
          %v1408 = vpop.permute.xlu0 %1407
          %1409 = vrot.lane.b32.xlu0 %v1398, 127
          %v1410 = vpop.permute.xlu0 %1409
          %v1415 = vsel %vm1275, %v1404, 0.0
          %v1416 = vsel %vm1276, %v1406, 0.0
          %v1417 = vsel %vm1277, %v1408, 0.0
          %v1418 = vsel %vm1278, %v1410, 0.0
          %v1419 = vadd.f32 %v1415, 0.0
          %v1420 = vadd.f32 %v1416, 0.0
          %v1421 = vadd.f32 %v1417, 0.0
          %v1422 = vadd.f32 %v1418, 0.0
          %v1423 = vsel %vm1297, %v1395, 0.0
          %v1424 = vsel %vm1298, %v1396, 0.0
          %v1425 = vsel %vm1299, %v1397, 0.0
          %v1426 = vsel %vm1300, %v1398, 0.0
          %v1427 = vadd.f32 %v1419, %v1423
          %v1428 = vadd.f32 %v1420, %v1424
          %v1429 = vadd.f32 %v1421, %v1425
          %v1430 = vadd.f32 %v1422, %v1426
          %v1431 = vadd.f32 %v1335, %v1427
          %v1432 = vadd.f32 %v1336, %v1428
          %v1433 = vadd.f32 %v1337, %v1429
          %v1434 = vadd.f32 %v1338, %v1430
          %v1435 = vsub.f32 0.0, %v1431
          %v1436 = vsub.f32 0.0, %v1432
          %v1437 = vsub.f32 0.0, %v1433
          %v1438 = vsub.f32 0.0, %v1434
          %s1439 = smul.u32 %s28, 32
          %v1440 = vlaneseq
          %v1441 = vshrl.u32 %v1440, 7
          %v1442 = vadd.s32 %v1441, 8
          %v1443 = vadd.s32 %v1441, 16
          %v1444 = vadd.s32 %v1441, 24
          %v1445 = vstv %s1439
          %v1446 = vadd.s32 %v1445, %v1441
          %v1447 = vadd.s32 %v1445, %v1442
          %v1448 = vadd.s32 %v1445, %v1443
          %v1449 = vadd.s32 %v1445, %v1444
          %vm1450 = vcmp.lt.s32.totalorder %v1446, 70
          %vm1451 = vcmp.lt.s32.totalorder %v1447, 70
          %vm1452 = vcmp.lt.s32.totalorder %v1448, 70
          %vm1453 = vcmp.lt.s32.totalorder %v1449, 70
          %v1454 = vsel %vm1450, %v1435, 0.0
          %v1455 = vsel %vm1451, %v1436, 0.0
          %v1456 = vsel %vm1452, %v1437, 0.0
          %v1457 = vsel %vm1453, %v1438, 0.0
          %1458 = vst.msk [vmem:[%s339] sm:$0xff] %vm799, %v1454
          %1459 = vst.msk [vmem:[%s339 + $0x8] sm:$0xff] %vm799, %v1455
          %1460 = vst.msk [vmem:[%s339 + $0x10] sm:$0xff] %vm799, %v1456
          %1461 = vst.msk [vmem:[%s339 + $0x18] sm:$0xff] %vm799, %v1457
        $region60: #{tpu_custom_call.1} parent=43 // pred_fallthru
          _
        %s1462 = sand.u32 %s190, 1
        %s1463 = sand.u32 %s190, 1
        %s1464 = smul.addr %s1463, 32
        %s1465 = scalar_lea.vmem [#allocation8], %s1464
        // Predicated region
        $region61: #{tpu_custom_call.1} parent=43 // pred_check
          %p1466 = pneg %p200
        $region62: #{tpu_custom_call.1} parent=43 // pred_check_branch
          %1468 = sbr.rel (%p1466) target = $region64
        $region63: #{tpu_custom_call.1} parent=43 // pred_region
          %s1469 = smul.u32 4, %s28
          %s1470 = ssub.s32 9, %s1469
          %p1471 = scmp.lt.s32.totalorder %s1470, 4
          %s1472 = scalar_select %p1471, %s1470, 4
          %s1473 = smul.u32 128, %s1472
          %p1474 = scmp.ne.s32.totalorder 0, %s1473
          %s1475 = smul.addr %s1469, 8
          %s1476 = scalar_lea.vmem %s7, %s1475
          // Predicated region
          $region65: #{tpu_custom_call.1} parent=63 // pred_check
            %p1477 = pneg %p1474
          $region66: #{tpu_custom_call.1} parent=63 // pred_check_branch
            %1479 = sbr.rel (%p1477) target = $region68
          $region67: #{tpu_custom_call.1} parent=63 // pred_region
            // Predicated region
            $region69: #{tpu_custom_call.1} parent=67 // pred_check
              _
            $region70: #{tpu_custom_call.1} parent=67 // pred_check_branch
              %1481 = sbr.rel (0) target = $region72
            $region71: #{tpu_custom_call.1} parent=67 // pred_region
              // Predicated region
              $region91: #{tpu_custom_call.1} parent=71 // pred_check
                _
              $region92: #{tpu_custom_call.1} parent=71 // pred_check_branch
                %1536 = sbr.rel (0) target = $region94
              $region93: #{tpu_custom_call.1} parent=71 // pred_region
                %s1537 = sshrl.u32 %s1472, 2
                // While loop
                $region95: #{tpu_custom_call.1} parent=93 // loop_pre_header
                  _
                $region96: #{tpu_custom_call.1} parent=93 // loop_header
                  %s1539 = sphi 0, %s1541
                  %p1540 = scmp.ge.s32.totalorder %s1539, %s1537
                  %s1544 = sphi 0, %s1557
                  %s1545 = sphi %s1465, %s1560
                  %s1546 = sphi %s1476, %s1561
                $region97: #{tpu_custom_call.1} parent=93 // loop_header_branch
                  %1543 = sbr.rel (%p1540) target = $region101
                $region98: #{tpu_custom_call.1} parent=93 // loop_body
                  %v1547 = vld [vmem:[%s1545] sm:$0xff]
                  %1548 = vst [vmem:[%s1546] sm:$0xff] %v1547
                  %v1549 = vld [vmem:[%s1545 + $0x8] sm:$0xff]
                  %1550 = vst [vmem:[%s1546 + $0x8] sm:$0xff] %v1549
                  %v1551 = vld [vmem:[%s1545 + $0x10] sm:$0xff]
                  %1552 = vst [vmem:[%s1546 + $0x10] sm:$0xff] %v1551
                  %v1553 = vld [vmem:[%s1545 + $0x18] sm:$0xff]
                  %1554 = vst [vmem:[%s1546 + $0x18] sm:$0xff] %v1553
                  %s1555 = sadd.s32 1, %s1544
                  %p1556 = scmp.ge.s32.totalorder %s1555, %s1537
                  %s1557 = scalar_select %p1556, 0, %s1555
                  %s1558 = smul.u32 %s1557, 32
                  %s1559 = smul.u32 %s1557, 32
                  %s1560 = scalar_lea.vmem %s1465, %s1558 [#allocation8]
                  %s1561 = scalar_lea.vmem %s1476, %s1559
                $region99: #{tpu_custom_call.1} parent=93 // loop_footer
                  %s1541 = sadd.s32 %s1539, 1
                $region100: #{tpu_custom_call.1} parent=93 // loop_footer_branch
                  %1538 = sbr.rel target = $region96
                $region101: #{tpu_custom_call.1} parent=93 // loop_exit
                  _
                %s1562 = sshrl.u32 %s1472, 2
                %s1563 = sand.u32 %s1472, 3
                %s1564 = smul.u32 %s1562, 4
                %s1565 = smul.u32 8, %s1564
                %s1566 = scalar_lea.vmem %s1465, %s1565 [#allocation8]
                %s1567 = smul.u32 8, %s1564
                %s1568 = scalar_lea.vmem %s1476, %s1567
                // While loop
                $region102: #{tpu_custom_call.1} parent=93 // loop_pre_header
                  _
                $region103: #{tpu_custom_call.1} parent=93 // loop_header
                  %s1570 = sphi 0, %s1572
                  %p1571 = scmp.ge.s32.totalorder %s1570, %s1563
                  %s1575 = sphi 0, %s1582
                  %s1576 = sphi %s1566, %s1585
                  %s1577 = sphi %s1568, %s1586
                $region104: #{tpu_custom_call.1} parent=93 // loop_header_branch
                  %1574 = sbr.rel (%p1571) target = $region108
                $region105: #{tpu_custom_call.1} parent=93 // loop_body
                  %v1578 = vld [vmem:[%s1576] sm:$0xff]
                  %1579 = vst [vmem:[%s1577] sm:$0xff] %v1578
                  %s1580 = sadd.s32 1, %s1575
                  %p1581 = scmp.ge.s32.totalorder %s1580, %s1563
                  %s1582 = scalar_select %p1581, 0, %s1580
                  %s1583 = smul.u32 %s1582, 8
                  %s1584 = smul.u32 %s1582, 8
                  %s1585 = scalar_lea.vmem %s1566, %s1583 [#allocation8]
                  %s1586 = scalar_lea.vmem %s1568, %s1584
                $region106: #{tpu_custom_call.1} parent=93 // loop_footer
                  %s1572 = sadd.s32 %s1570, 1
                $region107: #{tpu_custom_call.1} parent=93 // loop_footer_branch
                  %1569 = sbr.rel target = $region103
                $region108: #{tpu_custom_call.1} parent=93 // loop_exit
                  _
              $region94: #{tpu_custom_call.1} parent=71 // pred_fallthru
                _
              // Predicated region
              $region109: #{tpu_custom_call.1} parent=71 // pred_check
                _
              $region110: #{tpu_custom_call.1} parent=71 // pred_check_branch
                %1588 = sbr.rel target = $region112
              $region111: #{tpu_custom_call.1} parent=71 // pred_region
                _
              $region112: #{tpu_custom_call.1} parent=71 // pred_fallthru
                _
            $region72: #{tpu_custom_call.1} parent=67 // pred_fallthru
              _
            // Predicated region
            $region73: #{tpu_custom_call.1} parent=67 // pred_check
              _
            $region74: #{tpu_custom_call.1} parent=67 // pred_check_branch
              %1483 = sbr.rel target = $region76
            $region75: #{tpu_custom_call.1} parent=67 // pred_region
              %s1485 = sshrl.u32 %s1472, 2
              // While loop
              $region77: #{tpu_custom_call.1} parent=75 // loop_pre_header
                _
              $region78: #{tpu_custom_call.1} parent=75 // loop_header
                %s1487 = sphi 0, %s1489
                %p1488 = scmp.ge.s32.totalorder %s1487, %s1485
                %s1492 = sphi 0, %s1505
                %s1493 = sphi %s1465, %s1508
                %s1494 = sphi %s1476, %s1509
              $region79: #{tpu_custom_call.1} parent=75 // loop_header_branch
                %1491 = sbr.rel (%p1488) target = $region83
              $region80: #{tpu_custom_call.1} parent=75 // loop_body
                %v1495 = vld [vmem:[%s1493] sm:$0xff]
                %1496 = vst [vmem:[%s1494] sm:$0xff] %v1495
                %v1497 = vld [vmem:[%s1493 + $0x8] sm:$0xff]
                %1498 = vst [vmem:[%s1494 + $0x8] sm:$0xff] %v1497
                %v1499 = vld [vmem:[%s1493 + $0x10] sm:$0xff]
                %1500 = vst [vmem:[%s1494 + $0x10] sm:$0xff] %v1499
                %v1501 = vld [vmem:[%s1493 + $0x18] sm:$0xff]
                %1502 = vst [vmem:[%s1494 + $0x18] sm:$0xff] %v1501
                %s1503 = sadd.s32 1, %s1492
                %p1504 = scmp.ge.s32.totalorder %s1503, %s1485
                %s1505 = scalar_select %p1504, 0, %s1503
                %s1506 = smul.u32 %s1505, 32
                %s1507 = smul.u32 %s1505, 32
                %s1508 = scalar_lea.vmem %s1465, %s1506 [#allocation8]
                %s1509 = scalar_lea.vmem %s1476, %s1507
              $region81: #{tpu_custom_call.1} parent=75 // loop_footer
                %s1489 = sadd.s32 %s1487, 1
              $region82: #{tpu_custom_call.1} parent=75 // loop_footer_branch
                %1486 = sbr.rel target = $region78
              $region83: #{tpu_custom_call.1} parent=75 // loop_exit
                _
              %s1510 = sshrl.u32 %s1472, 2
              %s1511 = sand.u32 %s1472, 3
              %s1512 = smul.u32 %s1510, 4
              %s1513 = smul.u32 8, %s1512
              %s1514 = scalar_lea.vmem %s1465, %s1513 [#allocation8]
              %s1515 = smul.u32 8, %s1512
              %s1516 = scalar_lea.vmem %s1476, %s1515
              // While loop
              $region84: #{tpu_custom_call.1} parent=75 // loop_pre_header
                _
              $region85: #{tpu_custom_call.1} parent=75 // loop_header
                %s1518 = sphi 0, %s1520
                %p1519 = scmp.ge.s32.totalorder %s1518, %s1511
                %s1523 = sphi 0, %s1530
                %s1524 = sphi %s1514, %s1533
                %s1525 = sphi %s1516, %s1534
              $region86: #{tpu_custom_call.1} parent=75 // loop_header_branch
                %1522 = sbr.rel (%p1519) target = $region90
              $region87: #{tpu_custom_call.1} parent=75 // loop_body
                %v1526 = vld [vmem:[%s1524] sm:$0xff]
                %1527 = vst [vmem:[%s1525] sm:$0xff] %v1526
                %s1528 = sadd.s32 1, %s1523
                %p1529 = scmp.ge.s32.totalorder %s1528, %s1511
                %s1530 = scalar_select %p1529, 0, %s1528
                %s1531 = smul.u32 %s1530, 8
                %s1532 = smul.u32 %s1530, 8
                %s1533 = scalar_lea.vmem %s1514, %s1531 [#allocation8]
                %s1534 = scalar_lea.vmem %s1516, %s1532
              $region88: #{tpu_custom_call.1} parent=75 // loop_footer
                %s1520 = sadd.s32 %s1518, 1
              $region89: #{tpu_custom_call.1} parent=75 // loop_footer_branch
                %1517 = sbr.rel target = $region85
              $region90: #{tpu_custom_call.1} parent=75 // loop_exit
                _
            $region76: #{tpu_custom_call.1} parent=67 // pred_fallthru
              _
          $region68: #{tpu_custom_call.1} parent=63 // pred_fallthru
            _
          %1589 = vnop
        $region64: #{tpu_custom_call.1} parent=43 // pred_fallthru
          _
      $region44: #{tpu_custom_call.1} parent=5 // pred_fallthru
        _
      %p1590 = scmp.le.s32.totalorder 2, %s19
      // Predicated region
      $region113: #{tpu_custom_call.1} parent=5 // pred_check
        %p1591 = pneg %p1590
      $region114: #{tpu_custom_call.1} parent=5 // pred_check_branch
        %1593 = sbr.rel (%p1591) target = $region116
      $region115: #{tpu_custom_call.1} parent=5 // pred_region
        %s1594 = ssub.s32 %s19, 2
        // Predicated region
        $region117: #{tpu_custom_call.1} parent=115 // pred_check
          %p1595 = pneg %p206
        $region118: #{tpu_custom_call.1} parent=115 // pred_check_branch
          %1597 = sbr.rel (%p1595) target = $region120
        $region119: #{tpu_custom_call.1} parent=115 // pred_region
          %s1598 = sand.u32 %s191, 1
          %s1599 = sand.u32 %s191, 1
          %s1600 = smul.addr %s1599, 32
          %s1601 = scalar_lea.vmem [#allocation8], %s1600
        $region120: #{tpu_custom_call.1} parent=115 // pred_fallthru
          _
      $region116: #{tpu_custom_call.1} parent=5 // pred_fallthru
        _
    $region6: #{tpu_custom_call.1} parent=1 // loop_footer
      %s23 = sadd.s32 1, %s19
    $region7: #{tpu_custom_call.1} parent=1 // loop_footer_branch
      %18 = sbr.rel target = $region3
    $region8: #{tpu_custom_call.1} parent=1 // loop_exit
      _

</llo_original>
